<compile_context>
chip_gen: v7x
topology: tpu7x:2x2x1
jax: 0.10.0
libtpu: 0.0.40
codegen_flags: <defaults>
</compile_context>

<pallas_src>
import jax
import jax.numpy as jnp
import numpy as np
from jax.experimental import pallas as pl
from jax.experimental.pallas import tpu as pltpu


def decoder_kernel(ids_ref,                     # SMEM (B,) int32  (scalar prefetch)
                   h_ref, enc_ref,              # (2,B,H), (B,S,H)
                   emb_ref,                     # (V,E)
                   attn_w_ref, attn_b_ref, v_ref,
                   w_l0_ref, b_l0_ref,          # packed GRU layer 0: (E+2H, 6H), (1, 6H)
                   w_l1_ref, b_l1_ref,          # packed GRU layer 1: (2H, 6H),   (1, 6H)
                   fc_w_ref, fc_b_ref,          # (H,V), (1,V)
                   pred_ref, hnew_ref, a_ref,   # outputs
                   emb_sc):                     # VMEM scratch (B,E)
    B, S, H = enc_ref.shape
    E = emb_ref.shape[1]
    G = 3 * H

    # ---- embedding lookup: dynamic row gather via scalar-prefetched ids ----
    for b in range(B):                                         # B is small & static
        emb_sc[pl.ds(b, 1), :] = emb_ref[pl.ds(ids_ref[b], 1), :]
    embedded = emb_sc[...]                                     # (B, E)

    enc = enc_ref[...]                                         # (B, S, H)
    h_bot = h_ref[0]                                           # (B, H)  hidden[0]
    h_top = h_ref[1]                                           # (B, H)  hidden[-1]

    # ---------------- Attention ----------------
    # energy = tanh(cat([h_rep, enc]) @ W_attn + b)
    #        = tanh(h_top @ W_attn[:H] + enc @ W_attn[H:] + b)
    w_h = attn_w_ref[0:H, :]                                   # (H, H)
    w_e = attn_w_ref[H:2 * H, :]                               # (H, H)
    h_proj = jnp.dot(h_top, w_h, preferred_element_type=jnp.float32)   # (B, H)
    # single 2-D MXU matmul for the encoder projection
    e_proj = jnp.dot(enc.reshape(B * S, H), w_e,
                     preferred_element_type=jnp.float32).reshape(B, S, H)
    energy = jnp.tanh(h_proj[:, None, :] + e_proj + attn_b_ref[...])   # (B, S, H)

    scores = jnp.sum(v_ref[...] * energy, axis=-1)             # (B, S)
    scores = scores - jnp.max(scores, axis=1, keepdims=True)   # stable softmax over src_len
    e = jnp.exp(scores)
    denom = jnp.sum(e, axis=1, keepdims=True)
    a = e * pl.reciprocal(denom, approx=True)                  # divide on the EUP slot
    a_ref[...] = a

    # attended = bmm(a.unsqueeze(1), enc).squeeze(1)  -- on the MXU
    attended = jax.lax.dot_general(
        a[:, None, :], enc,
        dimension_numbers=(((2,), (1,)), ((0,), (0,))),
        preferred_element_type=jnp.float32)[:, 0, :]           # (B, H)

    # ---------------- 2-layer GRU, one step ----------------
    def gru_gates(gi, gh, h_prev):
        r = jax.nn.sigmoid(gi[:, 0:H] + gh[:, 0:H])
        z = jax.nn.sigmoid(gi[:, H:2 * H] + gh[:, H:2 * H])
        n = jnp.tanh(gi[:, 2 * H:3 * H] + r * gh[:, 2 * H:3 * H])
        return (1.0 - z) * n + z * h_prev

    # layer 0: one fused matmul  [embedded|attended|h_bot] @ blockdiag(W_ih0, W_hh0)
    x0 = jnp.concatenate([embedded, attended, h_bot], axis=-1)          # (B, E+2H)
    g0 = (jnp.dot(x0, w_l0_ref[...], preferred_element_type=jnp.float32)
          + b_l0_ref[...])                                              # (B, 6H)
    h1 = gru_gates(g0[:, 0:G], g0[:, G:2 * G], h_bot)                   # (B, H)

    # TODO(synk): nn.GRU dropout(0.2) between layers is training-mode only; eval (identity) semantics used.
    # layer 1: one fused matmul  [h1|h_top] @ blockdiag(W_ih1, W_hh1)
    x1 = jnp.concatenate([h1, h_top], axis=-1)                          # (B, 2H)
    g1 = (jnp.dot(x1, w_l1_ref[...], preferred_element_type=jnp.float32)
          + b_l1_ref[...])                                              # (B, 6H)
    h2 = gru_gates(g1[:, 0:G], g1[:, G:2 * G], h_top)                   # (B, H)

    hnew_ref[0] = h1
    hnew_ref[1] = h2

    # ---------------- fc_out ----------------
    pred_ref[...] = (jnp.dot(h2, fc_w_ref[...], preferred_element_type=jnp.float32)
                     + fc_b_ref[...])                                   # (B, V)


def init_params(key, V, E, H):
    ks = jax.random.split(key, 14)
    u = lambda k, shp: jax.random.uniform(k, shp, jnp.float32, -0.1, 0.1)
    return dict(
        emb=u(ks[0], (V, E)),               # nn.Embedding(output_size, embedding_dim)
        attn_w=u(ks[1], (2 * H, H)),        # attn Linear(2H -> H), pre-transposed
        attn_b=u(ks[2], (1, H)),
        v=u(ks[3], (1, H)),                 # attention.v
        wih0=u(ks[4], (E + H, 3 * H)),      # GRU l0 weight_ih^T
        whh0=u(ks[5], (H, 3 * H)),          # GRU l0 weight_hh^T
        bih0=u(ks[6], (1, 3 * H)),
        bhh0=u(ks[7], (1, 3 * H)),
        wih1=u(ks[8], (H, 3 * H)),          # GRU l1 weight_ih^T
        whh1=u(ks[9], (H, 3 * H)),
        bih1=u(ks[10], (1, 3 * H)),
        bhh1=u(ks[11], (1, 3 * H)),
        fc_w=u(ks[12], (H, V)),             # fc_out Linear(H -> V), pre-transposed
        fc_b=u(ks[13], (1, V)),
    )


def _pack_gru_layer(wih, whh, bih, bhh):
    """Pack one GRU layer so gi and gh come out of a SINGLE MXU matmul:
         [x | h] @ [[W_ih, 0], [0, W_hh]] = [x@W_ih | h@W_hh]
    The candidate gate needs gi_n and gh_n separate (n = tanh(gi_n + r*gh_n)),
    so a block-diagonal pack (not a plain row-concat) is required."""
    k_i, g = wih.shape
    k_h = whh.shape[0]
    w = jnp.zeros((k_i + k_h, 2 * g), jnp.float32)
    w = w.at[:k_i, :g].set(wih)
    w = w.at[k_i:, g:].set(whh)
    b = jnp.concatenate([bih, bhh], axis=-1)          # (1, 2*g)
    return w, b


@jax.jit
def decoder_forward(params, input_ids, hidden, encoder_outputs):
    B, S, H = encoder_outputs.shape
    V, E = params['emb'].shape

    # pad batch to a full sublane group (8) so tiles/stores are not all-masked
    B_pad = ((B + 7) // 8) * 8
    ids = jnp.zeros((B_pad,), jnp.int32).at[:B].set(
        input_ids.reshape(B).astype(jnp.int32))
    hidden_p = jnp.zeros((2, B_pad, H), jnp.float32).at[:, :B, :].set(hidden)
    enc_p = jnp.zeros((B_pad, S, H), jnp.float32).at[:B].set(encoder_outputs)

    w_l0, b_l0 = _pack_gru_layer(params['wih0'], params['whh0'],
                                 params['bih0'], params['bhh0'])
    w_l1, b_l1 = _pack_gru_layer(params['wih1'], params['whh1'],
                                 params['bih1'], params['bhh1'])

    vmem = pl.BlockSpec(memory_space=pltpu.MemorySpace.VMEM)
    args = (hidden_p, enc_p, params['emb'],
            params['attn_w'], params['attn_b'], params['v'],
            w_l0, b_l0, w_l1, b_l1,
            params['fc_w'], params['fc_b'])

    grid_spec = pltpu.PrefetchScalarGridSpec(
        num_scalar_prefetch=1,              # token ids land in SMEM
        grid=(1,),
        in_specs=[vmem] * len(args),
        out_specs=(vmem, vmem, vmem),
        scratch_shapes=[pltpu.VMEM((B_pad, E), jnp.float32)],
    )

    pred, hnew, a = pl.pallas_call(
        decoder_kernel,
        out_shape=(jax.ShapeDtypeStruct((B_pad, V), jnp.float32),      # prediction
                   jax.ShapeDtypeStruct((2, B_pad, H), jnp.float32),   # new hidden
                   jax.ShapeDtypeStruct((B_pad, S), jnp.float32)),     # attention weights
        grid_spec=grid_spec,
        compiler_params=pltpu.CompilerParams(
            dimension_semantics=("arbitrary",),
            vmem_limit_bytes=32 * 1024 * 1024),
    )(ids, *args)

    return pred[:B], hnew[:, :B], a[:B]


def decoder_reference(params, input_ids, hidden, encoder_outputs):
    """Pure-JAX reference mirroring the PyTorch forward (eval mode)."""
    B, S, H = encoder_outputs.shape
    emb = params['emb'][input_ids.reshape(B)]                       # (B, E)
    h_top = hidden[1]
    h_rep = jnp.broadcast_to(h_top[:, None, :], (B, S, H))
    cat = jnp.concatenate([h_rep, encoder_outputs], axis=-1)
    energy = jnp.tanh(cat @ params['attn_w'] + params['attn_b'])
    scores = jnp.sum(params['v'] * energy, axis=-1)
    a = jax.nn.softmax(scores, axis=1)
    attended = jnp.einsum('bs,bsh->bh', a, encoder_outputs)
    rnn_in = jnp.concatenate([emb, attended], axis=-1)

    def cell(x, h, wih, whh, bih, bhh):
        gi = x @ wih + bih
        gh = h @ whh + bhh
        r = jax.nn.sigmoid(gi[:, :H] + gh[:, :H])
        z = jax.nn.sigmoid(gi[:, H:2 * H] + gh[:, H:2 * H])
        n = jnp.tanh(gi[:, 2 * H:] + r * gh[:, 2 * H:])
        return (1.0 - z) * n + z * h

    h1 = cell(rnn_in, hidden[0], params['wih0'], params['whh0'],
              params['bih0'], params['bhh0'])
    h2 = cell(h1, hidden[1], params['wih1'], params['whh1'],
              params['bih1'], params['bhh1'])
    pred = h2 @ params['fc_w'] + params['fc_b']
    return pred, jnp.stack([h1, h2]), a


if __name__ == "__main__":
    B, S, H, E, V = 2, 8, 32, 32, 16  # batch, src_len, hidden_dim, embedding_dim, output_size
    key = jax.random.PRNGKey(0)
    kp, kh, ke, ki = jax.random.split(key, 4)

    params = init_params(kp, V, E, H)
    hidden = jax.random.normal(kh, (2, B, H), jnp.float32)          # (num_layers, B, H)
    encoder_outputs = jax.random.normal(ke, (B, S, H), jnp.float32)
    input_ids = jax.random.randint(ki, (B, 1), 0, V, dtype=jnp.int32)

    pred, hnew, a = jax.block_until_ready(
        decoder_forward(params, input_ids, hidden, encoder_outputs))

    rpred, rhnew, ra = decoder_reference(params, input_ids, hidden, encoder_outputs)
    # slightly relaxed tolerance: softmax uses the EUP approximate reciprocal
    np.testing.assert_allclose(np.asarray(pred), np.asarray(rpred), rtol=2e-3, atol=2e-3)
    np.testing.assert_allclose(np.asarray(hnew), np.asarray(rhnew), rtol=2e-3, atol=2e-3)
    np.testing.assert_allclose(np.asarray(a), np.asarray(ra), rtol=2e-3, atol=2e-3)

    print("KERNEL_OK")
</pallas_src>

<mosaic_0001>
module attributes {stable_mosaic.version = 11 : i64} {
  func.func @decoder_kernel(%arg0: i32, %arg1: memref<8xi32, #tpu.memory_space<smem>>, %arg2: memref<2x8x32xf32, #tpu.memory_space<vmem>>, %arg3: memref<8x8x32xf32, #tpu.memory_space<vmem>>, %arg4: memref<16x32xf32, #tpu.memory_space<vmem>>, %arg5: memref<64x32xf32, #tpu.memory_space<vmem>>, %arg6: memref<1x32xf32, #tpu.memory_space<vmem>>, %arg7: memref<1x32xf32, #tpu.memory_space<vmem>>, %arg8: memref<96x192xf32, #tpu.memory_space<vmem>>, %arg9: memref<1x192xf32, #tpu.memory_space<vmem>>, %arg10: memref<64x192xf32, #tpu.memory_space<vmem>>, %arg11: memref<1x192xf32, #tpu.memory_space<vmem>>, %arg12: memref<32x16xf32, #tpu.memory_space<vmem>>, %arg13: memref<1x16xf32, #tpu.memory_space<vmem>>, %arg14: memref<8x16xf32, #tpu.memory_space<vmem>>, %arg15: memref<2x8x32xf32, #tpu.memory_space<vmem>>, %arg16: memref<8x8xf32, #tpu.memory_space<vmem>>, %arg17: memref<8x32xf32, #tpu.memory_space<vmem>>) attributes {dimension_semantics = [#tpu.dimension_semantics<arbitrary>], iteration_bounds = array<i64: 1>, scalar_prefetch = 1 : i64, scratch_operands = 1 : i64, tpu.core_type = #tpu.core_type<tc>, window_params = [{pipeline_mode = #tpu.pipeline_mode<synchronous>, transform_indices = @transform_0, window_bounds = array<i64: 2, 8, 32>}, {pipeline_mode = #tpu.pipeline_mode<synchronous>, transform_indices = @transform_1, window_bounds = array<i64: 8, 8, 32>}, {pipeline_mode = #tpu.pipeline_mode<synchronous>, transform_indices = @transform_2, window_bounds = array<i64: 16, 32>}, {pipeline_mode = #tpu.pipeline_mode<synchronous>, transform_indices = @transform_3, window_bounds = array<i64: 64, 32>}, {pipeline_mode = #tpu.pipeline_mode<synchronous>, transform_indices = @transform_4, window_bounds = array<i64: 1, 32>}, {pipeline_mode = #tpu.pipeline_mode<synchronous>, transform_indices = @transform_5, window_bounds = array<i64: 1, 32>}, {pipeline_mode = #tpu.pipeline_mode<synchronous>, transform_indices = @transform_6, window_bounds = array<i64: 96, 192>}, {pipeline_mode = #tpu.pipeline_mode<synchronous>, transform_indices = @transform_7, window_bounds = array<i64: 1, 192>}, {pipeline_mode = #tpu.pipeline_mode<synchronous>, transform_indices = @transform_8, window_bounds = array<i64: 64, 192>}, {pipeline_mode = #tpu.pipeline_mode<synchronous>, transform_indices = @transform_9, window_bounds = array<i64: 1, 192>}, {pipeline_mode = #tpu.pipeline_mode<synchronous>, transform_indices = @transform_10, window_bounds = array<i64: 32, 16>}, {pipeline_mode = #tpu.pipeline_mode<synchronous>, transform_indices = @transform_11, window_bounds = array<i64: 1, 16>}, {pipeline_mode = #tpu.pipeline_mode<synchronous>, transform_indices = @transform_12, window_bounds = array<i64: 8, 16>}, {pipeline_mode = #tpu.pipeline_mode<synchronous>, transform_indices = @transform_13, window_bounds = array<i64: 2, 8, 32>}, {pipeline_mode = #tpu.pipeline_mode<synchronous>, transform_indices = @transform_14, window_bounds = array<i64: 8, 8>}]} {
    %c0 = arith.constant 0 : index
    %0 = memref.load %arg1[%c0] : memref<8xi32, #tpu.memory_space<smem>>
    %1 = arith.index_cast %0 : i32 to index
    %c0_0 = arith.constant 0 : index
    %2 = vector.load %arg4[%1, %c0_0] : memref<16x32xf32, #tpu.memory_space<vmem>>, vector<1x32xf32>
    %c0_1 = arith.constant 0 : index
    %c0_2 = arith.constant 0 : index
    %3 = vector.load %arg17[%c0_1, %c0_2] : memref<8x32xf32, #tpu.memory_space<vmem>>, vector<1x32xf32>
    tpu.vector_store %arg17[%c0_1, %c0_2], %2 {strides = array<i32>} : memref<8x32xf32, #tpu.memory_space<vmem>>, vector<1x32xf32>,
    %c1 = arith.constant 1 : index
    %4 = memref.load %arg1[%c1] : memref<8xi32, #tpu.memory_space<smem>>
    %5 = arith.index_cast %4 : i32 to index
    %c0_3 = arith.constant 0 : index
    %6 = vector.load %arg4[%5, %c0_3] : memref<16x32xf32, #tpu.memory_space<vmem>>, vector<1x32xf32>
    %c1_4 = arith.constant 1 : index
    %c0_5 = arith.constant 0 : index
    %7 = vector.load %arg17[%c1_4, %c0_5] : memref<8x32xf32, #tpu.memory_space<vmem>>, vector<1x32xf32>
    tpu.vector_store %arg17[%c1_4, %c0_5], %6 {strides = array<i32>} : memref<8x32xf32, #tpu.memory_space<vmem>>, vector<1x32xf32>,
    %c2 = arith.constant 2 : index
    %8 = memref.load %arg1[%c2] : memref<8xi32, #tpu.memory_space<smem>>
    %9 = arith.index_cast %8 : i32 to index
    %c0_6 = arith.constant 0 : index
    %10 = vector.load %arg4[%9, %c0_6] : memref<16x32xf32, #tpu.memory_space<vmem>>, vector<1x32xf32>
    %c2_7 = arith.constant 2 : index
    %c0_8 = arith.constant 0 : index
    %11 = vector.load %arg17[%c2_7, %c0_8] : memref<8x32xf32, #tpu.memory_space<vmem>>, vector<1x32xf32>
    tpu.vector_store %arg17[%c2_7, %c0_8], %10 {strides = array<i32>} : memref<8x32xf32, #tpu.memory_space<vmem>>, vector<1x32xf32>,
    %c3 = arith.constant 3 : index
    %12 = memref.load %arg1[%c3] : memref<8xi32, #tpu.memory_space<smem>>
    %13 = arith.index_cast %12 : i32 to index
    %c0_9 = arith.constant 0 : index
    %14 = vector.load %arg4[%13, %c0_9] : memref<16x32xf32, #tpu.memory_space<vmem>>, vector<1x32xf32>
    %c3_10 = arith.constant 3 : index
    %c0_11 = arith.constant 0 : index
    %15 = vector.load %arg17[%c3_10, %c0_11] : memref<8x32xf32, #tpu.memory_space<vmem>>, vector<1x32xf32>
    tpu.vector_store %arg17[%c3_10, %c0_11], %14 {strides = array<i32>} : memref<8x32xf32, #tpu.memory_space<vmem>>, vector<1x32xf32>,
    %c4 = arith.constant 4 : index
    %16 = memref.load %arg1[%c4] : memref<8xi32, #tpu.memory_space<smem>>
    %17 = arith.index_cast %16 : i32 to index
    %c0_12 = arith.constant 0 : index
    %18 = vector.load %arg4[%17, %c0_12] : memref<16x32xf32, #tpu.memory_space<vmem>>, vector<1x32xf32>
    %c4_13 = arith.constant 4 : index
    %c0_14 = arith.constant 0 : index
    %19 = vector.load %arg17[%c4_13, %c0_14] : memref<8x32xf32, #tpu.memory_space<vmem>>, vector<1x32xf32>
    tpu.vector_store %arg17[%c4_13, %c0_14], %18 {strides = array<i32>} : memref<8x32xf32, #tpu.memory_space<vmem>>, vector<1x32xf32>,
    %c5 = arith.constant 5 : index
    %20 = memref.load %arg1[%c5] : memref<8xi32, #tpu.memory_space<smem>>
    %21 = arith.index_cast %20 : i32 to index
    %c0_15 = arith.constant 0 : index
    %22 = vector.load %arg4[%21, %c0_15] : memref<16x32xf32, #tpu.memory_space<vmem>>, vector<1x32xf32>
    %c5_16 = arith.constant 5 : index
    %c0_17 = arith.constant 0 : index
    %23 = vector.load %arg17[%c5_16, %c0_17] : memref<8x32xf32, #tpu.memory_space<vmem>>, vector<1x32xf32>
    tpu.vector_store %arg17[%c5_16, %c0_17], %22 {strides = array<i32>} : memref<8x32xf32, #tpu.memory_space<vmem>>, vector<1x32xf32>,
    %c6 = arith.constant 6 : index
    %24 = memref.load %arg1[%c6] : memref<8xi32, #tpu.memory_space<smem>>
    %25 = arith.index_cast %24 : i32 to index
    %c0_18 = arith.constant 0 : index
    %26 = vector.load %arg4[%25, %c0_18] : memref<16x32xf32, #tpu.memory_space<vmem>>, vector<1x32xf32>
    %c6_19 = arith.constant 6 : index
    %c0_20 = arith.constant 0 : index
    %27 = vector.load %arg17[%c6_19, %c0_20] : memref<8x32xf32, #tpu.memory_space<vmem>>, vector<1x32xf32>
    tpu.vector_store %arg17[%c6_19, %c0_20], %26 {strides = array<i32>} : memref<8x32xf32, #tpu.memory_space<vmem>>, vector<1x32xf32>,
    %c7 = arith.constant 7 : index
    %28 = memref.load %arg1[%c7] : memref<8xi32, #tpu.memory_space<smem>>
    %29 = arith.index_cast %28 : i32 to index
    %c0_21 = arith.constant 0 : index
    %30 = vector.load %arg4[%29, %c0_21] : memref<16x32xf32, #tpu.memory_space<vmem>>, vector<1x32xf32>
    %c7_22 = arith.constant 7 : index
    %c0_23 = arith.constant 0 : index
    %31 = vector.load %arg17[%c7_22, %c0_23] : memref<8x32xf32, #tpu.memory_space<vmem>>, vector<1x32xf32>
    tpu.vector_store %arg17[%c7_22, %c0_23], %30 {strides = array<i32>} : memref<8x32xf32, #tpu.memory_space<vmem>>, vector<1x32xf32>,
    %c0_24 = arith.constant 0 : index
    %c0_25 = arith.constant 0 : index
    %32 = vector.load %arg17[%c0_24, %c0_25] : memref<8x32xf32, #tpu.memory_space<vmem>>, vector<8x32xf32>
    %c0_26 = arith.constant 0 : index
    %c0_27 = arith.constant 0 : index
    %c0_28 = arith.constant 0 : index
    %33 = vector.load %arg3[%c0_26, %c0_27, %c0_28] : memref<8x8x32xf32, #tpu.memory_space<vmem>>, vector<8x8x32xf32>
    %c0_29 = arith.constant 0 : index
    %c0_30 = arith.constant 0 : index
    %c0_31 = arith.constant 0 : index
    %34 = vector.load %arg2[%c0_29, %c0_30, %c0_31] : memref<2x8x32xf32, #tpu.memory_space<vmem>>, vector<1x8x32xf32>
    %35 = vector.shape_cast %34 : vector<1x8x32xf32> to vector<8x32xf32>
    %c1_32 = arith.constant 1 : index
    %c0_33 = arith.constant 0 : index
    %c0_34 = arith.constant 0 : index
    %36 = vector.load %arg2[%c1_32, %c0_33, %c0_34] : memref<2x8x32xf32, #tpu.memory_space<vmem>>, vector<1x8x32xf32>
    %37 = vector.shape_cast %36 : vector<1x8x32xf32> to vector<8x32xf32>
    %c0_35 = arith.constant 0 : index
    %c0_36 = arith.constant 0 : index
    %38 = vector.load %arg5[%c0_35, %c0_36] : memref<64x32xf32, #tpu.memory_space<vmem>>, vector<32x32xf32>
    %c32 = arith.constant 32 : index
    %c0_37 = arith.constant 0 : index
    %39 = vector.load %arg5[%c32, %c0_37] : memref<64x32xf32, #tpu.memory_space<vmem>>, vector<32x32xf32>
    %cst = arith.constant dense<0.000000e+00> : vector<8x32xf32>
    %40 = tpu.matmul %37, %38, %cst {dimension_numbers = #tpu.dot_dimension_numbers<[1], [0], [0], [1], [0, 0, 1, 1], [], []>} : vector<8x32xf32>, vector<32x32xf32>, vector<8x32xf32> -> vector<8x32xf32>
    %41 = vector.shape_cast %33 : vector<8x8x32xf32> to vector<64x32xf32>
    %cst_38 = arith.constant dense<0.000000e+00> : vector<64x32xf32>
    %42 = tpu.matmul %41, %39, %cst_38 {dimension_numbers = #tpu.dot_dimension_numbers<[1], [0], [0], [1], [0, 0, 1, 1], [], []>} : vector<64x32xf32>, vector<32x32xf32>, vector<64x32xf32> -> vector<64x32xf32>
    %43 = vector.shape_cast %42 : vector<64x32xf32> to vector<8x8x32xf32>
    %44 = vector.shape_cast %40 : vector<8x32xf32> to vector<8x1x32xf32>
    %45 = vector.broadcast %44 : vector<8x1x32xf32> to vector<8x8x32xf32>
    %46 = arith.addf %45, %43 : vector<8x8x32xf32>
    %c0_39 = arith.constant 0 : index
    %c0_40 = arith.constant 0 : index
    %47 = vector.load %arg6[%c0_39, %c0_40] : memref<1x32xf32, #tpu.memory_space<vmem>>, vector<1x32xf32>
    %48 = vector.shape_cast %47 : vector<1x32xf32> to vector<1x1x32xf32>
    %49 = vector.broadcast %48 : vector<1x1x32xf32> to vector<8x8x32xf32>
    %50 = arith.addf %46, %49 : vector<8x8x32xf32>
    %51 = math.tanh %50 : vector<8x8x32xf32>
    %c0_41 = arith.constant 0 : index
    %c0_42 = arith.constant 0 : index
    %52 = vector.load %arg7[%c0_41, %c0_42] : memref<1x32xf32, #tpu.memory_space<vmem>>, vector<1x32xf32>
    %53 = vector.shape_cast %52 : vector<1x32xf32> to vector<1x1x32xf32>
    %54 = vector.broadcast %53 : vector<1x1x32xf32> to vector<8x8x32xf32>
    %55 = arith.mulf %54, %51 : vector<8x8x32xf32>
    %cst_43 = arith.constant dense<0.000000e+00> : vector<8x8xf32>
    %56 = vector.multi_reduction <add>, %55, %cst_43 [2] : vector<8x8x32xf32> to vector<8x8xf32>
    %cst_44 = arith.constant dense<0xFF800000> : vector<8xf32>
    %57 = vector.multi_reduction <maximumf>, %56, %cst_44 [1] : vector<8x8xf32> to vector<8xf32>
    %58 = vector.shape_cast %57 : vector<8xf32> to vector<8x1xf32>
    %59 = vector.broadcast %58 : vector<8x1xf32> to vector<8x8xf32>
    %60 = arith.subf %56, %59 : vector<8x8xf32>
    %61 = math.exp %60 : vector<8x8xf32>
    %cst_45 = arith.constant dense<0.000000e+00> : vector<8xf32>
    %62 = vector.multi_reduction <add>, %61, %cst_45 [1] : vector<8x8xf32> to vector<8xf32>
    %63 = vector.shape_cast %62 : vector<8xf32> to vector<8x1xf32>
    %64 = tpu.reciprocal %63 {approx = true} : vector<8x1xf32> -> vector<8x1xf32>
    %65 = vector.broadcast %64 : vector<8x1xf32> to vector<8x8xf32>
    %66 = arith.mulf %61, %65 : vector<8x8xf32>
    %c0_46 = arith.constant 0 : index
    %c0_47 = arith.constant 0 : index
    %67 = vector.load %arg16[%c0_46, %c0_47] : memref<8x8xf32, #tpu.memory_space<vmem>>, vector<8x8xf32>
    tpu.vector_store %arg16[%c0_46, %c0_47], %66 {strides = array<i32>} : memref<8x8xf32, #tpu.memory_space<vmem>>, vector<8x8xf32>,
    %68 = vector.shape_cast %66 : vector<8x8xf32> to vector<8x1x8xf32>
    %cst_48 = arith.constant dense<0.000000e+00> : vector<8x1x32xf32>
    %69 = tpu.matmul %68, %33, %cst_48 {dimension_numbers = #tpu.dot_dimension_numbers<[2], [1], [1], [2], [0, 0, 0, 1, 1, 2], [0], [0]>} : vector<8x1x8xf32>, vector<8x8x32xf32>, vector<8x1x32xf32> -> vector<8x1x32xf32>
    %70 = vector.shape_cast %69 : vector<8x1x32xf32> to vector<8x32xf32>
    %71 = tpu.concatenate %32, %70, %35 in 1 : vector<8x32xf32>, vector<8x32xf32>, vector<8x32xf32> -> vector<8x96xf32>
    %c0_49 = arith.constant 0 : index
    %c0_50 = arith.constant 0 : index
    %72 = vector.load %arg8[%c0_49, %c0_50] : memref<96x192xf32, #tpu.memory_space<vmem>>, vector<96x192xf32>
    %cst_51 = arith.constant dense<0.000000e+00> : vector<8x192xf32>
    %73 = tpu.matmul %71, %72, %cst_51 {dimension_numbers = #tpu.dot_dimension_numbers<[1], [0], [0], [1], [0, 0, 1, 1], [], []>} : vector<8x96xf32>, vector<96x192xf32>, vector<8x192xf32> -> vector<8x192xf32>
    %c0_52 = arith.constant 0 : index
    %c0_53 = arith.constant 0 : index
    %74 = vector.load %arg9[%c0_52, %c0_53] : memref<1x192xf32, #tpu.memory_space<vmem>>, vector<1x192xf32>
    %75 = vector.broadcast %74 : vector<1x192xf32> to vector<8x192xf32>
    %76 = arith.addf %73, %75 : vector<8x192xf32>
    %77 = vector.extract_strided_slice %76 {offsets = [0, 0], sizes = [8, 96], strides = [1, 1]} : vector<8x192xf32> to vector<8x96xf32>
    %78 = vector.extract_strided_slice %76 {offsets = [0, 96], sizes = [8, 96], strides = [1, 1]} : vector<8x192xf32> to vector<8x96xf32>
    %79 = vector.extract_strided_slice %77 {offsets = [0, 0], sizes = [8, 32], strides = [1, 1]} : vector<8x96xf32> to vector<8x32xf32>
    %80 = vector.extract_strided_slice %78 {offsets = [0, 0], sizes = [8, 32], strides = [1, 1]} : vector<8x96xf32> to vector<8x32xf32>
    %81 = arith.addf %79, %80 : vector<8x32xf32>
    %82 = arith.negf %81 : vector<8x32xf32>
    %83 = math.exp %82 : vector<8x32xf32>
    %cst_54 = arith.constant 1.000000e+00 : f32
    %84 = vector.broadcast %cst_54 : f32 to vector<8x32xf32>
    %85 = arith.addf %84, %83 : vector<8x32xf32>
    %86 = arith.divf %84, %85 : vector<8x32xf32>
    %87 = vector.extract_strided_slice %77 {offsets = [0, 32], sizes = [8, 32], strides = [1, 1]} : vector<8x96xf32> to vector<8x32xf32>
    %88 = vector.extract_strided_slice %78 {offsets = [0, 32], sizes = [8, 32], strides = [1, 1]} : vector<8x96xf32> to vector<8x32xf32>
    %89 = arith.addf %87, %88 : vector<8x32xf32>
    %90 = arith.negf %89 : vector<8x32xf32>
    %91 = math.exp %90 : vector<8x32xf32>
    %cst_55 = arith.constant 1.000000e+00 : f32
    %92 = vector.broadcast %cst_55 : f32 to vector<8x32xf32>
    %93 = arith.addf %92, %91 : vector<8x32xf32>
    %94 = arith.divf %92, %93 : vector<8x32xf32>
    %95 = vector.extract_strided_slice %77 {offsets = [0, 64], sizes = [8, 32], strides = [1, 1]} : vector<8x96xf32> to vector<8x32xf32>
    %96 = vector.extract_strided_slice %78 {offsets = [0, 64], sizes = [8, 32], strides = [1, 1]} : vector<8x96xf32> to vector<8x32xf32>
    %97 = arith.mulf %86, %96 : vector<8x32xf32>
    %98 = arith.addf %95, %97 : vector<8x32xf32>
    %99 = math.tanh %98 : vector<8x32xf32>
    %cst_56 = arith.constant 1.000000e+00 : f32
    %100 = vector.broadcast %cst_56 : f32 to vector<8x32xf32>
    %101 = arith.subf %100, %94 : vector<8x32xf32>
    %102 = arith.mulf %101, %99 : vector<8x32xf32>
    %103 = arith.mulf %94, %35 : vector<8x32xf32>
    %104 = arith.addf %102, %103 : vector<8x32xf32>
    %105 = tpu.concatenate %104, %37 in 1 : vector<8x32xf32>, vector<8x32xf32> -> vector<8x64xf32>
    %c0_57 = arith.constant 0 : index
    %c0_58 = arith.constant 0 : index
    %106 = vector.load %arg10[%c0_57, %c0_58] : memref<64x192xf32, #tpu.memory_space<vmem>>, vector<64x192xf32>
    %cst_59 = arith.constant dense<0.000000e+00> : vector<8x192xf32>
    %107 = tpu.matmul %105, %106, %cst_59 {dimension_numbers = #tpu.dot_dimension_numbers<[1], [0], [0], [1], [0, 0, 1, 1], [], []>} : vector<8x64xf32>, vector<64x192xf32>, vector<8x192xf32> -> vector<8x192xf32>
    %c0_60 = arith.constant 0 : index
    %c0_61 = arith.constant 0 : index
    %108 = vector.load %arg11[%c0_60, %c0_61] : memref<1x192xf32, #tpu.memory_space<vmem>>, vector<1x192xf32>
    %109 = vector.broadcast %108 : vector<1x192xf32> to vector<8x192xf32>
    %110 = arith.addf %107, %109 : vector<8x192xf32>
    %111 = vector.extract_strided_slice %110 {offsets = [0, 0], sizes = [8, 96], strides = [1, 1]} : vector<8x192xf32> to vector<8x96xf32>
    %112 = vector.extract_strided_slice %110 {offsets = [0, 96], sizes = [8, 96], strides = [1, 1]} : vector<8x192xf32> to vector<8x96xf32>
    %113 = vector.extract_strided_slice %111 {offsets = [0, 0], sizes = [8, 32], strides = [1, 1]} : vector<8x96xf32> to vector<8x32xf32>
    %114 = vector.extract_strided_slice %112 {offsets = [0, 0], sizes = [8, 32], strides = [1, 1]} : vector<8x96xf32> to vector<8x32xf32>
    %115 = arith.addf %113, %114 : vector<8x32xf32>
    %116 = arith.negf %115 : vector<8x32xf32>
    %117 = math.exp %116 : vector<8x32xf32>
    %cst_62 = arith.constant 1.000000e+00 : f32
    %118 = vector.broadcast %cst_62 : f32 to vector<8x32xf32>
    %119 = arith.addf %118, %117 : vector<8x32xf32>
    %120 = arith.divf %118, %119 : vector<8x32xf32>
    %121 = vector.extract_strided_slice %111 {offsets = [0, 32], sizes = [8, 32], strides = [1, 1]} : vector<8x96xf32> to vector<8x32xf32>
    %122 = vector.extract_strided_slice %112 {offsets = [0, 32], sizes = [8, 32], strides = [1, 1]} : vector<8x96xf32> to vector<8x32xf32>
    %123 = arith.addf %121, %122 : vector<8x32xf32>
    %124 = arith.negf %123 : vector<8x32xf32>
    %125 = math.exp %124 : vector<8x32xf32>
    %cst_63 = arith.constant 1.000000e+00 : f32
    %126 = vector.broadcast %cst_63 : f32 to vector<8x32xf32>
    %127 = arith.addf %126, %125 : vector<8x32xf32>
    %128 = arith.divf %126, %127 : vector<8x32xf32>
    %129 = vector.extract_strided_slice %111 {offsets = [0, 64], sizes = [8, 32], strides = [1, 1]} : vector<8x96xf32> to vector<8x32xf32>
    %130 = vector.extract_strided_slice %112 {offsets = [0, 64], sizes = [8, 32], strides = [1, 1]} : vector<8x96xf32> to vector<8x32xf32>
    %131 = arith.mulf %120, %130 : vector<8x32xf32>
    %132 = arith.addf %129, %131 : vector<8x32xf32>
    %133 = math.tanh %132 : vector<8x32xf32>
    %cst_64 = arith.constant 1.000000e+00 : f32
    %134 = vector.broadcast %cst_64 : f32 to vector<8x32xf32>
    %135 = arith.subf %134, %128 : vector<8x32xf32>
    %136 = arith.mulf %135, %133 : vector<8x32xf32>
    %137 = arith.mulf %128, %37 : vector<8x32xf32>
    %138 = arith.addf %136, %137 : vector<8x32xf32>
    %c0_65 = arith.constant 0 : index
    %c0_66 = arith.constant 0 : index
    %c0_67 = arith.constant 0 : index
    %139 = vector.load %arg15[%c0_65, %c0_66, %c0_67] : memref<2x8x32xf32, #tpu.memory_space<vmem>>, vector<1x8x32xf32>
    %140 = vector.shape_cast %139 : vector<1x8x32xf32> to vector<8x32xf32>
    %141 = vector.shape_cast %104 : vector<8x32xf32> to vector<1x8x32xf32>
    tpu.vector_store %arg15[%c0_65, %c0_66, %c0_67], %141 {strides = array<i32>} : memref<2x8x32xf32, #tpu.memory_space<vmem>>, vector<1x8x32xf32>,
    %c1_68 = arith.constant 1 : index
    %c0_69 = arith.constant 0 : index
    %c0_70 = arith.constant 0 : index
    %142 = vector.load %arg15[%c1_68, %c0_69, %c0_70] : memref<2x8x32xf32, #tpu.memory_space<vmem>>, vector<1x8x32xf32>
    %143 = vector.shape_cast %142 : vector<1x8x32xf32> to vector<8x32xf32>
    %144 = vector.shape_cast %138 : vector<8x32xf32> to vector<1x8x32xf32>
    tpu.vector_store %arg15[%c1_68, %c0_69, %c0_70], %144 {strides = array<i32>} : memref<2x8x32xf32, #tpu.memory_space<vmem>>, vector<1x8x32xf32>,
    %c0_71 = arith.constant 0 : index
    %c0_72 = arith.constant 0 : index
    %145 = vector.load %arg12[%c0_71, %c0_72] : memref<32x16xf32, #tpu.memory_space<vmem>>, vector<32x16xf32>
    %cst_73 = arith.constant dense<0.000000e+00> : vector<8x16xf32>
    %146 = tpu.matmul %138, %145, %cst_73 {dimension_numbers = #tpu.dot_dimension_numbers<[1], [0], [0], [1], [0, 0, 1, 1], [], []>} : vector<8x32xf32>, vector<32x16xf32>, vector<8x16xf32> -> vector<8x16xf32>
    %c0_74 = arith.constant 0 : index
    %c0_75 = arith.constant 0 : index
    %147 = vector.load %arg13[%c0_74, %c0_75] : memref<1x16xf32, #tpu.memory_space<vmem>>, vector<1x16xf32>
    %148 = vector.broadcast %147 : vector<1x16xf32> to vector<8x16xf32>
    %149 = arith.addf %146, %148 : vector<8x16xf32>
    %c0_76 = arith.constant 0 : index
    %c0_77 = arith.constant 0 : index
    %150 = vector.load %arg14[%c0_76, %c0_77] : memref<8x16xf32, #tpu.memory_space<vmem>>, vector<8x16xf32>
    tpu.vector_store %arg14[%c0_76, %c0_77], %149 {strides = array<i32>} : memref<8x16xf32, #tpu.memory_space<vmem>>, vector<8x16xf32>,
    return
  }
  func.func @transform_0(%arg0: i32, %arg1: memref<8xi32, #tpu.memory_space<smem>>) -> (i32, i32, i32) {
    %c0_i32 = arith.constant 0 : i32
    %c0_i32_0 = arith.constant 0 : i32
    %c0_i32_1 = arith.constant 0 : i32
    %c0_i32_2 = arith.constant 0 : i32
    return %c0_i32, %c0_i32_0, %c0_i32_1 : i32, i32, i32
  }
  func.func @transform_1(%arg0: i32, %arg1: memref<8xi32, #tpu.memory_space<smem>>) -> (i32, i32, i32) {
    %c0_i32 = arith.constant 0 : i32
    %c0_i32_0 = arith.constant 0 : i32
    %c0_i32_1 = arith.constant 0 : i32
    %c0_i32_2 = arith.constant 0 : i32
    return %c0_i32, %c0_i32_0, %c0_i32_1 : i32, i32, i32
  }
  func.func @transform_2(%arg0: i32, %arg1: memref<8xi32, #tpu.memory_space<smem>>) -> (i32, i32) {
    %c0_i32 = arith.constant 0 : i32
    %c0_i32_0 = arith.constant 0 : i32
    %c0_i32_1 = arith.constant 0 : i32
    return %c0_i32, %c0_i32_0 : i32, i32
  }
  func.func @transform_3(%arg0: i32, %arg1: memref<8xi32, #tpu.memory_space<smem>>) -> (i32, i32) {
    %c0_i32 = arith.constant 0 : i32
    %c0_i32_0 = arith.constant 0 : i32
    %c0_i32_1 = arith.constant 0 : i32
    return %c0_i32, %c0_i32_0 : i32, i32
  }
  func.func @transform_4(%arg0: i32, %arg1: memref<8xi32, #tpu.memory_space<smem>>) -> (i32, i32) {
    %c0_i32 = arith.constant 0 : i32
    %c0_i32_0 = arith.constant 0 : i32
    %c0_i32_1 = arith.constant 0 : i32
    return %c0_i32, %c0_i32_0 : i32, i32
  }
  func.func @transform_5(%arg0: i32, %arg1: memref<8xi32, #tpu.memory_space<smem>>) -> (i32, i32) {
    %c0_i32 = arith.constant 0 : i32
    %c0_i32_0 = arith.constant 0 : i32
    %c0_i32_1 = arith.constant 0 : i32
    return %c0_i32, %c0_i32_0 : i32, i32
  }
  func.func @transform_6(%arg0: i32, %arg1: memref<8xi32, #tpu.memory_space<smem>>) -> (i32, i32) {
    %c0_i32 = arith.constant 0 : i32
    %c0_i32_0 = arith.constant 0 : i32
    %c0_i32_1 = arith.constant 0 : i32
    return %c0_i32, %c0_i32_0 : i32, i32
  }
  func.func @transform_7(%arg0: i32, %arg1: memref<8xi32, #tpu.memory_space<smem>>) -> (i32, i32) {
    %c0_i32 = arith.constant 0 : i32
    %c0_i32_0 = arith.constant 0 : i32
    %c0_i32_1 = arith.constant 0 : i32
    return %c0_i32, %c0_i32_0 : i32, i32
  }
  func.func @transform_8(%arg0: i32, %arg1: memref<8xi32, #tpu.memory_space<smem>>) -> (i32, i32) {
    %c0_i32 = arith.constant 0 : i32
    %c0_i32_0 = arith.constant 0 : i32
    %c0_i32_1 = arith.constant 0 : i32
    return %c0_i32, %c0_i32_0 : i32, i32
  }
  func.func @transform_9(%arg0: i32, %arg1: memref<8xi32, #tpu.memory_space<smem>>) -> (i32, i32) {
    %c0_i32 = arith.constant 0 : i32
    %c0_i32_0 = arith.constant 0 : i32
    %c0_i32_1 = arith.constant 0 : i32
    return %c0_i32, %c0_i32_0 : i32, i32
  }
  func.func @transform_10(%arg0: i32, %arg1: memref<8xi32, #tpu.memory_space<smem>>) -> (i32, i32) {
    %c0_i32 = arith.constant 0 : i32
    %c0_i32_0 = arith.constant 0 : i32
    %c0_i32_1 = arith.constant 0 : i32
    return %c0_i32, %c0_i32_0 : i32, i32
  }
  func.func @transform_11(%arg0: i32, %arg1: memref<8xi32, #tpu.memory_space<smem>>) -> (i32, i32) {
    %c0_i32 = arith.constant 0 : i32
    %c0_i32_0 = arith.constant 0 : i32
    %c0_i32_1 = arith.constant 0 : i32
    return %c0_i32, %c0_i32_0 : i32, i32
  }
  func.func @transform_12(%arg0: i32, %arg1: memref<8xi32, #tpu.memory_space<smem>>) -> (i32, i32) {
    %c0_i32 = arith.constant 0 : i32
    %c0_i32_0 = arith.constant 0 : i32
    %c0_i32_1 = arith.constant 0 : i32
    return %c0_i32, %c0_i32_0 : i32, i32
  }
  func.func @transform_13(%arg0: i32, %arg1: memref<8xi32, #tpu.memory_space<smem>>) -> (i32, i32, i32) {
    %c0_i32 = arith.constant 0 : i32
    %c0_i32_0 = arith.constant 0 : i32
    %c0_i32_1 = arith.constant 0 : i32
    %c0_i32_2 = arith.constant 0 : i32
    return %c0_i32, %c0_i32_0, %c0_i32_1 : i32, i32, i32
  }
  func.func @transform_14(%arg0: i32, %arg1: memref<8xi32, #tpu.memory_space<smem>>) -> (i32, i32) {
    %c0_i32 = arith.constant 0 : i32
    %c0_i32_0 = arith.constant 0 : i32
    %c0_i32_1 = arith.constant 0 : i32
    return %c0_i32, %c0_i32_0 : i32, i32
  }
}

</mosaic_0001>

<llo_original>
// kernel: decoder_forward.1
$region0: #{decoder_forward.1}
  #allocation0 [shape = 'u32[]', space=smem, size = 0x4, offset = 0x4, fixed_abs, tag = 'smem constant byte address 0x4 - core index']
  #allocation1 [shape = 'u32[144,128]{1,0:T(1,128)}', space=vmem, size = 0x12000, scoped, tag = 'internal scratch']
  #allocation2 [shape = 'f32[8,32]{1,0:T(8,128)}', space=vmem, size = 0x1000, scoped, tag = 'scratch operand']
  #allocation3 [shape = 's32[1]{0}', space=sflag, size = 0x4, scoped, tag = 'scoped memory for decoder_forward.1']
  #allocation4 [shape = 'u8[512]{0}', space=smem, size = 0x200, scoped, tag = 'prefetched SMEM operand 0']
  %s0 = inlined_call_operand.vmem [shape: s32[8], index: 0, kind: input, shape index: {}]
  %s1 = inlined_call_operand.vmem [shape: f32[2,8,32], index: 1, kind: input, shape index: {}]
  %s2 = inlined_call_operand.vmem [shape: f32[8,8,32], index: 2, kind: input, shape index: {}]
  %s3 = inlined_call_operand.vmem [shape: f32[16,32], index: 3, kind: input, shape index: {}]
  %s4 = inlined_call_operand.vmem [shape: f32[64,32], index: 4, kind: input, shape index: {}]
  %s5 = inlined_call_operand.vmem [shape: f32[1,32], index: 5, kind: input, shape index: {}]
  %s6 = inlined_call_operand.vmem [shape: f32[1,32], index: 6, kind: input, shape index: {}]
  %s7 = inlined_call_operand.vmem [shape: f32[96,192], index: 7, kind: input, shape index: {}]
  %s8 = inlined_call_operand.vmem [shape: f32[1,192], index: 8, kind: input, shape index: {}]
  %s9 = inlined_call_operand.vmem [shape: f32[64,192], index: 9, kind: input, shape index: {}]
  %s10 = inlined_call_operand.vmem [shape: f32[1,192], index: 10, kind: input, shape index: {}]
  %s11 = inlined_call_operand.vmem [shape: f32[32,16], index: 11, kind: input, shape index: {}]
  %s12 = inlined_call_operand.vmem [shape: f32[1,16], index: 12, kind: input, shape index: {}]
  %s13 = inlined_call_operand.vmem [shape: f32[8,16], index: 13, kind: output, shape index: {0}]
  %s14 = inlined_call_operand.vmem [shape: f32[2,8,32], index: 14, kind: output, shape index: {1}]
  %s15 = inlined_call_operand.vmem [shape: f32[8,8], index: 15, kind: output, shape index: {2}]
  %16 = xla_tuple %s13, %s14, %s15
  %s17 = sld [smem:[#allocation0]]
  $region74: #{decoder_forward.1} parent=0
    _
  %s19 = ssub.s32 1, %s17
  %s20 = scalar_select 0, %s19, %s17
  %s21 = sshll.u32 %s0, 4
  %s22 = int_to_ptr.vmem [resolvable:$true] %s21
  %24 = dma.vmem_to_smem %s22, 16, [#allocation4], [#allocation3]
  %25 = dma.done [#allocation3], 16
  %26 = sfence
  // Predicated region
  $region2: #{decoder_forward.1} parent=0 // pred_check
    _
  $region3: #{decoder_forward.1} parent=0 // pred_check_branch
    %28 = sbr.rel (0) target = $region5
  $region4: #{decoder_forward.1} parent=0 // pred_region
    _
  $region5: #{decoder_forward.1} parent=0 // pred_fallthru
    _
  // Predicated region
  $region6: #{decoder_forward.1} parent=0 // pred_check
    _
  $region7: #{decoder_forward.1} parent=0 // pred_check_branch
    %30 = sbr.rel (0) target = $region9
  $region8: #{decoder_forward.1} parent=0 // pred_region
    _
  $region9: #{decoder_forward.1} parent=0 // pred_fallthru
    _
  // Predicated region
  $region10: #{decoder_forward.1} parent=0 // pred_check
    _
  $region11: #{decoder_forward.1} parent=0 // pred_check_branch
    %32 = sbr.rel (0) target = $region13
  $region12: #{decoder_forward.1} parent=0 // pred_region
    _
  $region13: #{decoder_forward.1} parent=0 // pred_fallthru
    _
  // Predicated region
  $region14: #{decoder_forward.1} parent=0 // pred_check
    _
  $region15: #{decoder_forward.1} parent=0 // pred_check_branch
    %34 = sbr.rel (0) target = $region17
  $region16: #{decoder_forward.1} parent=0 // pred_region
    _
  $region17: #{decoder_forward.1} parent=0 // pred_fallthru
    _
  // Predicated region
  $region18: #{decoder_forward.1} parent=0 // pred_check
    _
  $region19: #{decoder_forward.1} parent=0 // pred_check_branch
    %36 = sbr.rel (0) target = $region21
  $region20: #{decoder_forward.1} parent=0 // pred_region
    _
  $region21: #{decoder_forward.1} parent=0 // pred_fallthru
    _
  // Predicated region
  $region22: #{decoder_forward.1} parent=0 // pred_check
    _
  $region23: #{decoder_forward.1} parent=0 // pred_check_branch
    %38 = sbr.rel (0) target = $region25
  $region24: #{decoder_forward.1} parent=0 // pred_region
    _
  $region25: #{decoder_forward.1} parent=0 // pred_fallthru
    _
  // Predicated region
  $region26: #{decoder_forward.1} parent=0 // pred_check
    _
  $region27: #{decoder_forward.1} parent=0 // pred_check_branch
    %40 = sbr.rel (0) target = $region29
  $region28: #{decoder_forward.1} parent=0 // pred_region
    _
  $region29: #{decoder_forward.1} parent=0 // pred_fallthru
    _
  // Predicated region
  $region30: #{decoder_forward.1} parent=0 // pred_check
    _
  $region31: #{decoder_forward.1} parent=0 // pred_check_branch
    %42 = sbr.rel (0) target = $region33
  $region32: #{decoder_forward.1} parent=0 // pred_region
    _
  $region33: #{decoder_forward.1} parent=0 // pred_fallthru
    _
  // Predicated region
  $region34: #{decoder_forward.1} parent=0 // pred_check
    _
  $region35: #{decoder_forward.1} parent=0 // pred_check_branch
    %44 = sbr.rel (0) target = $region37
  $region36: #{decoder_forward.1} parent=0 // pred_region
    _
  $region37: #{decoder_forward.1} parent=0 // pred_fallthru
    _
  // Predicated region
  $region38: #{decoder_forward.1} parent=0 // pred_check
    _
  $region39: #{decoder_forward.1} parent=0 // pred_check_branch
    %46 = sbr.rel (0) target = $region41
  $region40: #{decoder_forward.1} parent=0 // pred_region
    _
  $region41: #{decoder_forward.1} parent=0 // pred_fallthru
    _
  // Predicated region
  $region42: #{decoder_forward.1} parent=0 // pred_check
    _
  $region43: #{decoder_forward.1} parent=0 // pred_check_branch
    %48 = sbr.rel (0) target = $region45
  $region44: #{decoder_forward.1} parent=0 // pred_region
    _
  $region45: #{decoder_forward.1} parent=0 // pred_fallthru
    _
  // Predicated region
  $region46: #{decoder_forward.1} parent=0 // pred_check
    _
  $region47: #{decoder_forward.1} parent=0 // pred_check_branch
    %50 = sbr.rel (0) target = $region49
  $region48: #{decoder_forward.1} parent=0 // pred_region
    _
  $region49: #{decoder_forward.1} parent=0 // pred_fallthru
    _
  %s51 = sld [smem:[#allocation4]]
  %s52 = scalar_lea.vmem %s3, %s51
  %v53 = vld [vmem:[%s52] sm:$0x1]
  %vm54 = vcmask 253952
  %55 = vst.msk [vmem:[#allocation2] sm:$0x1] %vm54, %v53
  %s56 = sld [smem:[#allocation4 + $0x1]]
  %s57 = scalar_lea.vmem %s3, %s56
  %v58 = vld [vmem:[%s57] sm:$0x1]
  %59 = vst.msk [vmem:[#allocation2 + $0x1] sm:$0x1] %vm54, %v58
  %s60 = sld [smem:[#allocation4 + $0x2]]
  %s61 = scalar_lea.vmem %s3, %s60
  %v62 = vld [vmem:[%s61] sm:$0x1]
  %63 = vst.msk [vmem:[#allocation2 + $0x2] sm:$0x1] %vm54, %v62
  %s64 = sld [smem:[#allocation4 + $0x3]]
  %s65 = scalar_lea.vmem %s3, %s64
  %v66 = vld [vmem:[%s65] sm:$0x1]
  %67 = vst.msk [vmem:[#allocation2 + $0x3] sm:$0x1] %vm54, %v66
  %s68 = sld [smem:[#allocation4 + $0x4]]
  %s69 = scalar_lea.vmem %s3, %s68
  %v70 = vld [vmem:[%s69] sm:$0x1]
  %71 = vst.msk [vmem:[#allocation2 + $0x4] sm:$0x1] %vm54, %v70
  %s72 = sld [smem:[#allocation4 + $0x5]]
  %s73 = scalar_lea.vmem %s3, %s72
  %v74 = vld [vmem:[%s73] sm:$0x1]
  %75 = vst.msk [vmem:[#allocation2 + $0x5] sm:$0x1] %vm54, %v74
  %s76 = sld [smem:[#allocation4 + $0x6]]
  %s77 = scalar_lea.vmem %s3, %s76
  %v78 = vld [vmem:[%s77] sm:$0x1]
  %79 = vst.msk [vmem:[#allocation2 + $0x6] sm:$0x1] %vm54, %v78
  %s80 = sld [smem:[#allocation4 + $0x7]]
  %s81 = scalar_lea.vmem %s3, %s80
  %v82 = vld [vmem:[%s81] sm:$0x1]
  %83 = vst.msk [vmem:[#allocation2 + $0x7] sm:$0x1] %vm54, %v82
  %v84 = vld [vmem:[#allocation2] sm:$0xff]
  %v85 = vld [vmem:[%s2] sm:$0xff]
  %v86 = vld [vmem:[%s2 + $0x8] sm:$0xff]
  %v87 = vld [vmem:[%s2 + $0x10] sm:$0xff]
  %v88 = vld [vmem:[%s2 + $0x18] sm:$0xff]
  %v89 = vld [vmem:[%s2 + $0x20] sm:$0xff]
  %v90 = vld [vmem:[%s2 + $0x28] sm:$0xff]
  %v91 = vld [vmem:[%s2 + $0x30] sm:$0xff]
  %v92 = vld [vmem:[%s2 + $0x38] sm:$0xff]
  %v93 = vld [vmem:[%s1] sm:$0xff]
  %s94 = scalar_lea.vmem %s1, 8
  %v95 = vld [vmem:[%s94] sm:$0xff]
  %v96 = vld [vmem:[%s4] sm:$0xff]
  %v97 = vld [vmem:[%s4 + $0x8] sm:$0xff]
  %v98 = vld [vmem:[%s4 + $0x10] sm:$0xff]
  %v99 = vld [vmem:[%s4 + $0x18] sm:$0xff]
  %v100 = vld [vmem:[%s4 + $0x20] sm:$0xff]
  %v101 = vld [vmem:[%s4 + $0x28] sm:$0xff]
  %v102 = vld [vmem:[%s4 + $0x30] sm:$0xff]
  %v103 = vld [vmem:[%s4 + $0x38] sm:$0xff]
  %vm104 = vcmask 261120
  %v106 = vsel %vm104, %v95, 0
  %108 = vmatprep.subr.mxu0 0.0
  %109 = vmatpush1.msra.mxu0 %v96
  %110 = vmatprep.subr.mxu0 0.0
  %111 = vmatpush1.msra.mxu0 %v97
  %112 = vmatprep.subr.mxu0 0.0
  %113 = vmatpush1.msra.mxu0 %v98
  %114 = vmatprep.subr.mxu0 0.0
  %115 = vmatpush1.msra.mxu0 %v99
  %116 = vmatprep.subr.mxu0 0.0
  %117 = vmatpush1.msra.mxu0 0.0
  %118 = vmatprep.subr.mxu0 0.0
  %119 = vmatpush1.msra.mxu0 0.0
  %120 = vmatprep.subr.mxu0 0.0
  %121 = vmatpush1.msra.mxu0 0.0
  %122 = vmatprep.subr.mxu0 0.0
  %123 = vmatpush1.msra.mxu0 0.0
  %124 = vmatprep.subr.mxu0 0.0
  %125 = vmatpush1.msra.mxu0 0.0
  %126 = vmatprep.subr.mxu0 0.0
  %127 = vmatpush1.msra.mxu0 0.0
  %128 = vmatprep.subr.mxu0 0.0
  %129 = vmatpush1.msra.mxu0 0.0
  %130 = vmatprep.subr.mxu0 0.0
  %131 = vmatpush1.msra.mxu0 0.0
  %132 = vmatprep.subr.mxu0 0.0
  %133 = vmatpush1.msra.mxu0 0.0
  %134 = vmatprep.subr.mxu0 0.0
  %135 = vmatpush1.msra.mxu0 0.0
  %136 = vmatprep.subr.mxu0 0.0
  %137 = vmatpush1.msra.mxu0 0.0
  %138 = vmatprep.subr.mxu0 0.0
  %139 = vmatpush1.msra.mxu0 0.0
  %140 = vmatprep.subr.mxu0 0.0
  %141 = vmatpush1.msra.mxu0 0.0
  %142 = vmatprep.subr.mxu0 0.0
  %143 = vmatpush1.msra.mxu0 0.0
  %144 = vmatprep.subr.mxu0 0.0
  %145 = vmatpush1.msra.mxu0 0.0
  %146 = vmatprep.subr.mxu0 0.0
  %147 = vmatpush1.msra.mxu0 0.0
  %148 = vmatprep.subr.mxu0 0.0
  %149 = vmatpush1.msra.mxu0 0.0
  %150 = vmatprep.subr.mxu0 0.0
  %151 = vmatpush1.msra.mxu0 0.0
  %152 = vmatprep.subr.mxu0 0.0
  %153 = vmatpush1.msra.mxu0 0.0
  %154 = vmatprep.subr.mxu0 0.0
  %155 = vmatpush1.msra.mxu0 0.0
  %156 = vmatprep.subr.mxu0 0.0
  %157 = vmatpush1.msra.mxu0 0.0
  %158 = vmatprep.subr.mxu0 0.0
  %159 = vmatpush1.msra.mxu0 0.0
  %160 = vmatprep.subr.mxu0 0.0
  %161 = vmatpush1.msra.mxu0 0.0
  %162 = vmatprep.subr.mxu0 0.0
  %163 = vmatpush1.msra.mxu0 0.0
  %164 = vmatprep.subr.mxu0 0.0
  %165 = vmatpush1.msra.mxu0 0.0
  %166 = vmatprep.subr.mxu0 0.0
  %167 = vmatpush1.msra.mxu0 0.0
  %168 = vmatprep.subr.mxu0 0.0
  %169 = vmatpush1.msra.mxu0 0.0
  %170 = vmatprep.subr.mxu0 0.0
  %171 = vmatpush1.msra.mxu0 0.0
  %172 = vmatprep.mubr.f32.mxu0 0.0
  %173 = vmatmul.mubr.f32.gmra.mrb[0].mxu0 %v106
  %v174 = vpop.f32.mrb[0].mxu0
  %v175 = vadd.f32 0.0, %v174
  %v176 = vpop.f32.mrb[0].mxu0
  %177 = vdwg.mxu0
  %v179 = vsel %vm104, %v85, 0
  %v182 = vsel %vm104, %v86, 0
  %v185 = vsel %vm104, %v87, 0
  %v188 = vsel %vm104, %v88, 0
  %v191 = vsel %vm104, %v89, 0
  %v194 = vsel %vm104, %v90, 0
  %v197 = vsel %vm104, %v91, 0
  %v200 = vsel %vm104, %v92, 0
  %202 = vmatprep.subr.mxu0 0.0
  %203 = vmatpush1.msra.mxu0 %v100
  %204 = vmatprep.subr.mxu0 0.0
  %205 = vmatpush1.msra.mxu0 %v101
  %206 = vmatprep.subr.mxu0 0.0
  %207 = vmatpush1.msra.mxu0 %v102
  %208 = vmatprep.subr.mxu0 0.0
  %209 = vmatpush1.msra.mxu0 %v103
  %210 = vmatprep.subr.mxu0 0.0
  %211 = vmatpush1.msra.mxu0 0.0
  %212 = vmatprep.subr.mxu0 0.0
  %213 = vmatpush1.msra.mxu0 0.0
  %214 = vmatprep.subr.mxu0 0.0
  %215 = vmatpush1.msra.mxu0 0.0
  %216 = vmatprep.subr.mxu0 0.0
  %217 = vmatpush1.msra.mxu0 0.0
  %218 = vmatprep.subr.mxu0 0.0
  %219 = vmatpush1.msra.mxu0 0.0
  %220 = vmatprep.subr.mxu0 0.0
  %221 = vmatpush1.msra.mxu0 0.0
  %222 = vmatprep.subr.mxu0 0.0
  %223 = vmatpush1.msra.mxu0 0.0
  %224 = vmatprep.subr.mxu0 0.0
  %225 = vmatpush1.msra.mxu0 0.0
  %226 = vmatprep.subr.mxu0 0.0
  %227 = vmatpush1.msra.mxu0 0.0
  %228 = vmatprep.subr.mxu0 0.0
  %229 = vmatpush1.msra.mxu0 0.0
  %230 = vmatprep.subr.mxu0 0.0
  %231 = vmatpush1.msra.mxu0 0.0
  %232 = vmatprep.subr.mxu0 0.0
  %233 = vmatpush1.msra.mxu0 0.0
  %234 = vmatprep.subr.mxu0 0.0
  %235 = vmatpush1.msra.mxu0 0.0
  %236 = vmatprep.subr.mxu0 0.0
  %237 = vmatpush1.msra.mxu0 0.0
  %238 = vmatprep.subr.mxu0 0.0
  %239 = vmatpush1.msra.mxu0 0.0
  %240 = vmatprep.subr.mxu0 0.0
  %241 = vmatpush1.msra.mxu0 0.0
  %242 = vmatprep.subr.mxu0 0.0
  %243 = vmatpush1.msra.mxu0 0.0
  %244 = vmatprep.subr.mxu0 0.0
  %245 = vmatpush1.msra.mxu0 0.0
  %246 = vmatprep.subr.mxu0 0.0
  %247 = vmatpush1.msra.mxu0 0.0
  %248 = vmatprep.subr.mxu0 0.0
  %249 = vmatpush1.msra.mxu0 0.0
  %250 = vmatprep.subr.mxu0 0.0
  %251 = vmatpush1.msra.mxu0 0.0
  %252 = vmatprep.subr.mxu0 0.0
  %253 = vmatpush1.msra.mxu0 0.0
  %254 = vmatprep.subr.mxu0 0.0
  %255 = vmatpush1.msra.mxu0 0.0
  %256 = vmatprep.subr.mxu0 0.0
  %257 = vmatpush1.msra.mxu0 0.0
  %258 = vmatprep.subr.mxu0 0.0
  %259 = vmatpush1.msra.mxu0 0.0
  %260 = vmatprep.subr.mxu0 0.0
  %261 = vmatpush1.msra.mxu0 0.0
  %262 = vmatprep.subr.mxu0 0.0
  %263 = vmatpush1.msra.mxu0 0.0
  %264 = vmatprep.subr.mxu0 0.0
  %265 = vmatpush1.msra.mxu0 0.0
  %266 = vmatprep.mubr.f32.mxu0 0.0
  %267 = vmatmul.mubr.f32.gmra.mrb[0].mxu0 %v179
  %v268 = vpop.f32.mrb[0].mxu0
  %v269 = vadd.f32 0.0, %v268
  %v270 = vpop.f32.mrb[0].mxu0
  %271 = vmatprep.mubr.f32.mxu0 0.0
  %272 = vmatmul.mubr.f32.gmra.mrb[0].mxu0 %v182
  %v273 = vpop.f32.mrb[0].mxu0
  %v274 = vadd.f32 0.0, %v273
  %v275 = vpop.f32.mrb[0].mxu0
  %276 = vmatprep.mubr.f32.mxu0 0.0
  %277 = vmatmul.mubr.f32.gmra.mrb[0].mxu0 %v185
  %v278 = vpop.f32.mrb[0].mxu0
  %v279 = vadd.f32 0.0, %v278
  %v280 = vpop.f32.mrb[0].mxu0
  %281 = vmatprep.mubr.f32.mxu0 0.0
  %282 = vmatmul.mubr.f32.gmra.mrb[0].mxu0 %v188
  %v283 = vpop.f32.mrb[0].mxu0
  %v284 = vadd.f32 0.0, %v283
  %v285 = vpop.f32.mrb[0].mxu0
  %286 = vmatprep.mubr.f32.mxu0 0.0
  %287 = vmatmul.mubr.f32.gmra.mrb[0].mxu0 %v191
  %v288 = vpop.f32.mrb[0].mxu0
  %v289 = vadd.f32 0.0, %v288
  %v290 = vpop.f32.mrb[0].mxu0
  %291 = vmatprep.mubr.f32.mxu0 0.0
  %292 = vmatmul.mubr.f32.gmra.mrb[0].mxu0 %v194
  %v293 = vpop.f32.mrb[0].mxu0
  %v294 = vadd.f32 0.0, %v293
  %v295 = vpop.f32.mrb[0].mxu0
  %296 = vmatprep.mubr.f32.mxu0 0.0
  %297 = vmatmul.mubr.f32.gmra.mrb[0].mxu0 %v197
  %v298 = vpop.f32.mrb[0].mxu0
  %v299 = vadd.f32 0.0, %v298
  %v300 = vpop.f32.mrb[0].mxu0
  %301 = vmatprep.mubr.f32.mxu0 0.0
  %302 = vmatmul.mubr.f32.gmra.mrb[0].mxu0 %v200
  %v303 = vpop.f32.mrb[0].mxu0
  %v304 = vadd.f32 0.0, %v303
  %v305 = vpop.f32.mrb[0].mxu0
  %306 = vdwg.mxu0
  %v308 = vcombine.high %v175, %v175
  %v310 = vunpack.c.l.s4 1966171168
  %v311 = vunpack.c.0.s8 %v310
  %v312 = vlaneseq
  %v313 = vshrl.u32 %v312, 7
  %v314 = vsub.s32 %v311, %v313
  %v315 = vrot.slane %v175, %v314
  %v317 = vunpack.c.l.s4 1966171168
  %v318 = vunpack.c.0.s8 %v317
  %v319 = vlaneseq
  %v320 = vshrl.u32 %v319, 7
  %v321 = vsub.s32 %v318, %v320
  %v322 = vrot.slane %v308, %v321
  %v323 = vcombine.high %v315, %v315
  %v324 = vcombine.high %v322, %v322
  %v326 = vunpack.c.l.s4 1966171168
  %v327 = vunpack.c.0.s8 %v326
  %v328 = vlaneseq
  %v329 = vshrl.u32 %v328, 7
  %v330 = vsub.s32 %v327, %v329
  %v331 = vrot.slane %v315, %v330
  %v333 = vunpack.c.l.s4 1966171168
  %v334 = vunpack.c.0.s8 %v333
  %v335 = vlaneseq
  %v336 = vshrl.u32 %v335, 7
  %v337 = vsub.s32 %v334, %v336
  %v338 = vrot.slane %v322, %v337
  %v340 = vunpack.c.l.s4 1966171168
  %v341 = vunpack.c.0.s8 %v340
  %v342 = vlaneseq
  %v343 = vshrl.u32 %v342, 7
  %v344 = vsub.s32 %v341, %v343
  %v345 = vrot.slane %v323, %v344
  %v347 = vunpack.c.l.s4 1966171168
  %v348 = vunpack.c.0.s8 %v347
  %v349 = vlaneseq
  %v350 = vshrl.u32 %v349, 7
  %v351 = vsub.s32 %v348, %v350
  %v352 = vrot.slane %v324, %v351
  %v353 = vcombine.high %v331, %v331
  %v354 = vcombine.high %v338, %v338
  %v355 = vcombine.high %v345, %v345
  %v356 = vcombine.high %v352, %v352
  %v357 = vlaneseq
  %v358 = vshrl.u32 %v357, 7
  %v359 = vsub.s32 0, %v358
  %v360 = vrot.slane %v331, %v359
  %v361 = vlaneseq
  %v362 = vshrl.u32 %v361, 7
  %v363 = vsub.s32 0, %v362
  %v364 = vrot.slane %v345, %v363
  %v365 = vlaneseq
  %v366 = vshrl.u32 %v365, 7
  %v367 = vsub.s32 0, %v366
  %v368 = vrot.slane %v353, %v367
  %v369 = vlaneseq
  %v370 = vshrl.u32 %v369, 7
  %v371 = vsub.s32 0, %v370
  %v372 = vrot.slane %v355, %v371
  %v373 = vlaneseq
  %v374 = vshrl.u32 %v373, 7
  %v375 = vsub.s32 0, %v374
  %v376 = vrot.slane %v338, %v375
  %v377 = vlaneseq
  %v378 = vshrl.u32 %v377, 7
  %v379 = vsub.s32 0, %v378
  %v380 = vrot.slane %v352, %v379
  %v381 = vlaneseq
  %v382 = vshrl.u32 %v381, 7
  %v383 = vsub.s32 0, %v382
  %v384 = vrot.slane %v354, %v383
  %v385 = vlaneseq
  %v386 = vshrl.u32 %v385, 7
  %v387 = vsub.s32 0, %v386
  %v388 = vrot.slane %v356, %v387
  %v397 = vadd.f32 %v360, %v269
  %v398 = vadd.f32 %v364, %v274
  %v399 = vadd.f32 %v368, %v279
  %v400 = vadd.f32 %v372, %v284
  %v401 = vadd.f32 %v376, %v289
  %v402 = vadd.f32 %v380, %v294
  %v403 = vadd.f32 %v384, %v299
  %v404 = vadd.f32 %v388, %v304
  %v405 = vld [vmem:[%s5] sm:$0x1]
  %v407 = vlaneseq
  %v408 = vshrl.u32 %v407, 7
  %v409 = vsub.s32 0, %v408
  %v410 = vrot.slane %v405, %v409
  %v412 = vadd.f32 %v397, %v410
  %v413 = vadd.f32 %v398, %v410
  %v414 = vadd.f32 %v399, %v410
  %v415 = vadd.f32 %v400, %v410
  %v416 = vadd.f32 %v401, %v410
  %v417 = vadd.f32 %v402, %v410
  %v418 = vadd.f32 %v403, %v410
  %v419 = vadd.f32 %v404, %v410
  %v420 = vtanh.pop %v412
  %v421 = vtanh.pop %v413
  %v422 = vtanh.pop %v414
  %v423 = vtanh.pop %v415
  %v424 = vtanh.pop %v416
  %v425 = vtanh.pop %v417
  %v426 = vtanh.pop %v418
  %v427 = vtanh.pop %v419
  %v428 = vld [vmem:[%s6] sm:$0x1]
  %v430 = vlaneseq
  %v431 = vshrl.u32 %v430, 7
  %v432 = vsub.s32 0, %v431
  %v433 = vrot.slane %v428, %v432
  %v435 = vmul.f32 %v433, %v420
  %v436 = vmul.f32 %v433, %v421
  %v437 = vmul.f32 %v433, %v422
  %v438 = vmul.f32 %v433, %v423
  %v439 = vmul.f32 %v433, %v424
  %v440 = vmul.f32 %v433, %v425
  %v441 = vmul.f32 %v433, %v426
  %v442 = vmul.f32 %v433, %v427
  %v443 = vsel %vm104, %v435, 0.0
  %444 = vadd.xlane.f32.xlu0 %v443
  %v445 = vpop.xlane.xlu0 %444
  %v446 = vsel %vm104, %v436, 0.0
  %447 = vadd.xlane.f32.xlu0 %v446
  %v448 = vpop.xlane.xlu0 %447
  %v449 = vsel %vm104, %v437, 0.0
  %450 = vadd.xlane.f32.xlu0 %v449
  %v451 = vpop.xlane.xlu0 %450
  %v452 = vsel %vm104, %v438, 0.0
  %453 = vadd.xlane.f32.xlu0 %v452
  %v454 = vpop.xlane.xlu0 %453
  %v455 = vsel %vm104, %v439, 0.0
  %456 = vadd.xlane.f32.xlu0 %v455
  %v457 = vpop.xlane.xlu0 %456
  %v458 = vsel %vm104, %v440, 0.0
  %459 = vadd.xlane.f32.xlu0 %v458
  %v460 = vpop.xlane.xlu0 %459
  %v461 = vsel %vm104, %v441, 0.0
  %462 = vadd.xlane.f32.xlu0 %v461
  %v463 = vpop.xlane.xlu0 %462
  %v464 = vsel %vm104, %v442, 0.0
  %465 = vadd.xlane.f32.xlu0 %v464
  %v466 = vpop.xlane.xlu0 %465
  %v475 = vlaneseq
  %v476 = vand.u32 %v475, 127
  %v477 = vlaneseq
  %v478 = vshrl.u32 %v477, 7
  %v479 = vsub.s32 %v476, %v478
  %v480 = vrot.slane %v445, %v479
  %v481 = vlaneseq
  %v482 = vshrl.u32 %v481, 7
  %v483 = vsub.s32 %v476, %v482
  %v484 = vrot.slane %v448, %v483
  %v485 = vlaneseq
  %v486 = vshrl.u32 %v485, 7
  %v487 = vsub.s32 %v476, %v486
  %v488 = vrot.slane %v451, %v487
  %v489 = vlaneseq
  %v490 = vshrl.u32 %v489, 7
  %v491 = vsub.s32 %v476, %v490
  %v492 = vrot.slane %v454, %v491
  %v493 = vlaneseq
  %v494 = vshrl.u32 %v493, 7
  %v495 = vsub.s32 %v476, %v494
  %v496 = vrot.slane %v457, %v495
  %v497 = vlaneseq
  %v498 = vshrl.u32 %v497, 7
  %v499 = vsub.s32 %v476, %v498
  %v500 = vrot.slane %v460, %v499
  %v501 = vlaneseq
  %v502 = vshrl.u32 %v501, 7
  %v503 = vsub.s32 %v476, %v502
  %v504 = vrot.slane %v463, %v503
  %v505 = vlaneseq
  %v506 = vshrl.u32 %v505, 7
  %v507 = vsub.s32 %v476, %v506
  %v508 = vrot.slane %v466, %v507
  %vm509 = vcmask 1041409
  %v510 = vsel %vm509, %v484, %v480
  %vm511 = vcmask 1042434
  %v512 = vsel %vm511, %v488, %v510
  %vm513 = vcmask 1043459
  %v514 = vsel %vm513, %v492, %v512
  %vm515 = vcmask 1044484
  %v516 = vsel %vm515, %v496, %v514
  %vm517 = vcmask 1045509
  %v518 = vsel %vm517, %v500, %v516
  %vm519 = vcmask 1046534
  %v520 = vsel %vm519, %v504, %v518
  %vm521 = vcmask 1047559
  %v522 = vsel %vm521, %v508, %v520
  %vm524 = vcmask 64512
  %v525 = vsel %vm524, %v522, -inf
  %526 = vmax.xlane.f32.xlu0 %v525
  %v527 = vpop.xlane.xlu0 %526
  %v529 = vlaneseq
  %v530 = vshrl.u32 %v529, 7
  %v531 = vsub.s32 0, %v530
  %v532 = vrot.slane %v527, %v531
  %v533 = vlaneseq
  %v534 = vshrl.u32 %v533, 7
  %v535 = vsub.s32 1, %v534
  %v536 = vrot.slane %v527, %v535
  %v537 = vlaneseq
  %v538 = vshrl.u32 %v537, 7
  %v539 = vsub.s32 2, %v538
  %v540 = vrot.slane %v527, %v539
  %v541 = vlaneseq
  %v542 = vshrl.u32 %v541, 7
  %v543 = vsub.s32 3, %v542
  %v544 = vrot.slane %v527, %v543
  %v545 = vlaneseq
  %v546 = vshrl.u32 %v545, 7
  %v547 = vsub.s32 4, %v546
  %v548 = vrot.slane %v527, %v547
  %v549 = vlaneseq
  %v550 = vshrl.u32 %v549, 7
  %v551 = vsub.s32 5, %v550
  %v552 = vrot.slane %v527, %v551
  %v553 = vlaneseq
  %v554 = vshrl.u32 %v553, 7
  %v555 = vsub.s32 6, %v554
  %v556 = vrot.slane %v527, %v555
  %v557 = vlaneseq
  %v558 = vshrl.u32 %v557, 7
  %v559 = vsub.s32 7, %v558
  %v560 = vrot.slane %v527, %v559
  %v569 = vsub.f32 %v445, %v532
  %v570 = vsub.f32 %v448, %v536
  %v571 = vsub.f32 %v451, %v540
  %v572 = vsub.f32 %v454, %v544
  %v573 = vsub.f32 %v457, %v548
  %v574 = vsub.f32 %v460, %v552
  %v575 = vsub.f32 %v463, %v556
  %v576 = vsub.f32 %v466, %v560
  %v577 = vmul.f32 %v569, 1.442695
  %v578 = vpow.pop %v577
  %v579 = vmul.f32 %v570, 1.442695
  %v580 = vpow.pop %v579
  %v581 = vmul.f32 %v571, 1.442695
  %v582 = vpow.pop %v581
  %v583 = vmul.f32 %v572, 1.442695
  %v584 = vpow.pop %v583
  %v585 = vmul.f32 %v573, 1.442695
  %v586 = vpow.pop %v585
  %v587 = vmul.f32 %v574, 1.442695
  %v588 = vpow.pop %v587
  %v589 = vmul.f32 %v575, 1.442695
  %v590 = vpow.pop %v589
  %v591 = vmul.f32 %v576, 1.442695
  %v592 = vpow.pop %v591
  %601 = vset.pattern.permute.xlu0 0
  %602 = vperm.xlu0 %601, %v578
  %v603 = vpop.permute.xlu0 %602
  %604 = vset.pattern.permute.xlu0 0
  %605 = vperm.xlu0 %604, %v580
  %v606 = vpop.permute.xlu0 %605
  %607 = vset.pattern.permute.xlu0 0
  %608 = vperm.xlu0 %607, %v582
  %v609 = vpop.permute.xlu0 %608
  %610 = vset.pattern.permute.xlu0 0
  %611 = vperm.xlu0 %610, %v584
  %v612 = vpop.permute.xlu0 %611
  %613 = vset.pattern.permute.xlu0 0
  %614 = vperm.xlu0 %613, %v586
  %v615 = vpop.permute.xlu0 %614
  %616 = vset.pattern.permute.xlu0 0
  %617 = vperm.xlu0 %616, %v588
  %v618 = vpop.permute.xlu0 %617
  %619 = vset.pattern.permute.xlu0 0
  %620 = vperm.xlu0 %619, %v590
  %v621 = vpop.permute.xlu0 %620
  %622 = vset.pattern.permute.xlu0 0
  %623 = vperm.xlu0 %622, %v592
  %v624 = vpop.permute.xlu0 %623
  %v625 = vlaneseq
  %v626 = vshrl.u32 %v625, 7
  %v627 = vsub.s32 %v476, %v626
  %v628 = vrot.slane %v603, %v627
  %v629 = vlaneseq
  %v630 = vshrl.u32 %v629, 7
  %v631 = vsub.s32 %v476, %v630
  %v632 = vrot.slane %v606, %v631
  %v633 = vlaneseq
  %v634 = vshrl.u32 %v633, 7
  %v635 = vsub.s32 %v476, %v634
  %v636 = vrot.slane %v609, %v635
  %v637 = vlaneseq
  %v638 = vshrl.u32 %v637, 7
  %v639 = vsub.s32 %v476, %v638
  %v640 = vrot.slane %v612, %v639
  %v641 = vlaneseq
  %v642 = vshrl.u32 %v641, 7
  %v643 = vsub.s32 %v476, %v642
  %v644 = vrot.slane %v615, %v643
  %v645 = vlaneseq
  %v646 = vshrl.u32 %v645, 7
  %v647 = vsub.s32 %v476, %v646
  %v648 = vrot.slane %v618, %v647
  %v649 = vlaneseq
  %v650 = vshrl.u32 %v649, 7
  %v651 = vsub.s32 %v476, %v650
  %v652 = vrot.slane %v621, %v651
  %v653 = vlaneseq
  %v654 = vshrl.u32 %v653, 7
  %v655 = vsub.s32 %v476, %v654
  %v656 = vrot.slane %v624, %v655
  %v657 = vsel %vm509, %v632, %v628
  %v658 = vsel %vm511, %v636, %v657
  %v659 = vsel %vm513, %v640, %v658
  %v660 = vsel %vm515, %v644, %v659
  %v661 = vsel %vm517, %v648, %v660
  %v662 = vsel %vm519, %v652, %v661
  %v663 = vsel %vm521, %v656, %v662
  %v665 = vsel %vm524, %v663, 0.0
  %666 = vadd.xlane.f32.xlu0 %v665
  %v667 = vpop.xlane.xlu0 %666
  %v668 = vrcp.pop %v667
  %v670 = vlaneseq
  %v671 = vshrl.u32 %v670, 7
  %v672 = vsub.s32 0, %v671
  %v673 = vrot.slane %v668, %v672
  %v674 = vlaneseq
  %v675 = vshrl.u32 %v674, 7
  %v676 = vsub.s32 1, %v675
  %v677 = vrot.slane %v668, %v676
  %v678 = vlaneseq
  %v679 = vshrl.u32 %v678, 7
  %v680 = vsub.s32 2, %v679
  %v681 = vrot.slane %v668, %v680
  %v682 = vlaneseq
  %v683 = vshrl.u32 %v682, 7
  %v684 = vsub.s32 3, %v683
  %v685 = vrot.slane %v668, %v684
  %v686 = vlaneseq
  %v687 = vshrl.u32 %v686, 7
  %v688 = vsub.s32 4, %v687
  %v689 = vrot.slane %v668, %v688
  %v690 = vlaneseq
  %v691 = vshrl.u32 %v690, 7
  %v692 = vsub.s32 5, %v691
  %v693 = vrot.slane %v668, %v692
  %v694 = vlaneseq
  %v695 = vshrl.u32 %v694, 7
  %v696 = vsub.s32 6, %v695
  %v697 = vrot.slane %v668, %v696
  %v698 = vlaneseq
  %v699 = vshrl.u32 %v698, 7
  %v700 = vsub.s32 7, %v699
  %v701 = vrot.slane %v668, %v700
  %v710 = vmul.f32 %v578, %v673
  %v711 = vmul.f32 %v580, %v677
  %v712 = vmul.f32 %v582, %v681
  %v713 = vmul.f32 %v584, %v685
  %v714 = vmul.f32 %v586, %v689
  %v715 = vmul.f32 %v588, %v693
  %v716 = vmul.f32 %v590, %v697
  %v717 = vmul.f32 %v592, %v701
  %726 = vset.pattern.permute.xlu0 0
  %727 = vperm.xlu0 %726, %v710
  %v728 = vpop.permute.xlu0 %727
  %729 = vset.pattern.permute.xlu0 0
  %730 = vperm.xlu0 %729, %v711
  %v731 = vpop.permute.xlu0 %730
  %732 = vset.pattern.permute.xlu0 0
  %733 = vperm.xlu0 %732, %v712
  %v734 = vpop.permute.xlu0 %733
  %735 = vset.pattern.permute.xlu0 0
  %736 = vperm.xlu0 %735, %v713
  %v737 = vpop.permute.xlu0 %736
  %738 = vset.pattern.permute.xlu0 0
  %739 = vperm.xlu0 %738, %v714
  %v740 = vpop.permute.xlu0 %739
  %741 = vset.pattern.permute.xlu0 0
  %742 = vperm.xlu0 %741, %v715
  %v743 = vpop.permute.xlu0 %742
  %744 = vset.pattern.permute.xlu0 0
  %745 = vperm.xlu0 %744, %v716
  %v746 = vpop.permute.xlu0 %745
  %747 = vset.pattern.permute.xlu0 0
  %748 = vperm.xlu0 %747, %v717
  %v749 = vpop.permute.xlu0 %748
  %v750 = vlaneseq
  %v751 = vshrl.u32 %v750, 7
  %v752 = vsub.s32 %v476, %v751
  %v753 = vrot.slane %v728, %v752
  %v754 = vlaneseq
  %v755 = vshrl.u32 %v754, 7
  %v756 = vsub.s32 %v476, %v755
  %v757 = vrot.slane %v731, %v756
  %v758 = vlaneseq
  %v759 = vshrl.u32 %v758, 7
  %v760 = vsub.s32 %v476, %v759
  %v761 = vrot.slane %v734, %v760
  %v762 = vlaneseq
  %v763 = vshrl.u32 %v762, 7
  %v764 = vsub.s32 %v476, %v763
  %v765 = vrot.slane %v737, %v764
  %v766 = vlaneseq
  %v767 = vshrl.u32 %v766, 7
  %v768 = vsub.s32 %v476, %v767
  %v769 = vrot.slane %v740, %v768
  %v770 = vlaneseq
  %v771 = vshrl.u32 %v770, 7
  %v772 = vsub.s32 %v476, %v771
  %v773 = vrot.slane %v743, %v772
  %v774 = vlaneseq
  %v775 = vshrl.u32 %v774, 7
  %v776 = vsub.s32 %v476, %v775
  %v777 = vrot.slane %v746, %v776
  %v778 = vlaneseq
  %v779 = vshrl.u32 %v778, 7
  %v780 = vsub.s32 %v476, %v779
  %v781 = vrot.slane %v749, %v780
  %v782 = vsel %vm509, %v757, %v753
  %v783 = vsel %vm511, %v761, %v782
  %v784 = vsel %vm513, %v765, %v783
  %v785 = vsel %vm515, %v769, %v784
  %v786 = vsel %vm517, %v773, %v785
  %v787 = vsel %vm519, %v777, %v786
  %v788 = vsel %vm521, %v781, %v787
  %790 = vst.msk [vmem:[%s15] sm:$0xff] %vm524, %v788
  %v791 = vsel %vm524, %v753, 0
  %793 = vmatprep.subr.mxu0 0.0
  %794 = vmatpush1.msra.mxu0 %v85
  %795 = vmatprep.subr.mxu0 0.0
  %796 = vmatpush1.msra.mxu0 0.0
  %797 = vmatprep.subr.mxu0 0.0
  %798 = vmatpush1.msra.mxu0 0.0
  %799 = vmatprep.subr.mxu0 0.0
  %800 = vmatpush1.msra.mxu0 0.0
  %801 = vmatprep.subr.mxu0 0.0
  %802 = vmatpush1.msra.mxu0 0.0
  %803 = vmatprep.subr.mxu0 0.0
  %804 = vmatpush1.msra.mxu0 0.0
  %805 = vmatprep.subr.mxu0 0.0
  %806 = vmatpush1.msra.mxu0 0.0
  %807 = vmatprep.subr.mxu0 0.0
  %808 = vmatpush1.msra.mxu0 0.0
  %809 = vmatprep.subr.mxu0 0.0
  %810 = vmatpush1.msra.mxu0 0.0
  %811 = vmatprep.subr.mxu0 0.0
  %812 = vmatpush1.msra.mxu0 0.0
  %813 = vmatprep.subr.mxu0 0.0
  %814 = vmatpush1.msra.mxu0 0.0
  %815 = vmatprep.subr.mxu0 0.0
  %816 = vmatpush1.msra.mxu0 0.0
  %817 = vmatprep.subr.mxu0 0.0
  %818 = vmatpush1.msra.mxu0 0.0
  %819 = vmatprep.subr.mxu0 0.0
  %820 = vmatpush1.msra.mxu0 0.0
  %821 = vmatprep.subr.mxu0 0.0
  %822 = vmatpush1.msra.mxu0 0.0
  %823 = vmatprep.subr.mxu0 0.0
  %824 = vmatpush1.msra.mxu0 0.0
  %825 = vmatprep.subr.mxu0 0.0
  %826 = vmatpush1.msra.mxu0 0.0
  %827 = vmatprep.subr.mxu0 0.0
  %828 = vmatpush1.msra.mxu0 0.0
  %829 = vmatprep.subr.mxu0 0.0
  %830 = vmatpush1.msra.mxu0 0.0
  %831 = vmatprep.subr.mxu0 0.0
  %832 = vmatpush1.msra.mxu0 0.0
  %833 = vmatprep.subr.mxu0 0.0
  %834 = vmatpush1.msra.mxu0 0.0
  %835 = vmatprep.subr.mxu0 0.0
  %836 = vmatpush1.msra.mxu0 0.0
  %837 = vmatprep.subr.mxu0 0.0
  %838 = vmatpush1.msra.mxu0 0.0
  %839 = vmatprep.subr.mxu0 0.0
  %840 = vmatpush1.msra.mxu0 0.0
  %841 = vmatprep.subr.mxu0 0.0
  %842 = vmatpush1.msra.mxu0 0.0
  %843 = vmatprep.subr.mxu0 0.0
  %844 = vmatpush1.msra.mxu0 0.0
  %845 = vmatprep.subr.mxu0 0.0
  %846 = vmatpush1.msra.mxu0 0.0
  %847 = vmatprep.subr.mxu0 0.0
  %848 = vmatpush1.msra.mxu0 0.0
  %849 = vmatprep.subr.mxu0 0.0
  %850 = vmatpush1.msra.mxu0 0.0
  %851 = vmatprep.subr.mxu0 0.0
  %852 = vmatpush1.msra.mxu0 0.0
  %853 = vmatprep.subr.mxu0 0.0
  %854 = vmatpush1.msra.mxu0 0.0
  %855 = vmatprep.subr.mxu0 0.0
  %856 = vmatpush1.msra.mxu0 0.0
  %857 = vmatprep.mubr.f32.mxu0 0.0
  %858 = vmatmul.mubr.f32.gmra.mrb[0].mxu0 %v791
  %v859 = vpop.f32.mrb[0].mxu0
  %v860 = vadd.f32 0.0, %v859
  %v861 = vpop.f32.mrb[0].mxu0
  %862 = vdwg.mxu0
  %v863 = vsel %vm524, %v757, 0
  %865 = vmatprep.subr.mxu0 0.0
  %866 = vmatpush1.msra.mxu0 %v86
  %867 = vmatprep.subr.mxu0 0.0
  %868 = vmatpush1.msra.mxu0 0.0
  %869 = vmatprep.subr.mxu0 0.0
  %870 = vmatpush1.msra.mxu0 0.0
  %871 = vmatprep.subr.mxu0 0.0
  %872 = vmatpush1.msra.mxu0 0.0
  %873 = vmatprep.subr.mxu0 0.0
  %874 = vmatpush1.msra.mxu0 0.0
  %875 = vmatprep.subr.mxu0 0.0
  %876 = vmatpush1.msra.mxu0 0.0
  %877 = vmatprep.subr.mxu0 0.0
  %878 = vmatpush1.msra.mxu0 0.0
  %879 = vmatprep.subr.mxu0 0.0
  %880 = vmatpush1.msra.mxu0 0.0
  %881 = vmatprep.subr.mxu0 0.0
  %882 = vmatpush1.msra.mxu0 0.0
  %883 = vmatprep.subr.mxu0 0.0
  %884 = vmatpush1.msra.mxu0 0.0
  %885 = vmatprep.subr.mxu0 0.0
  %886 = vmatpush1.msra.mxu0 0.0
  %887 = vmatprep.subr.mxu0 0.0
  %888 = vmatpush1.msra.mxu0 0.0
  %889 = vmatprep.subr.mxu0 0.0
  %890 = vmatpush1.msra.mxu0 0.0
  %891 = vmatprep.subr.mxu0 0.0
  %892 = vmatpush1.msra.mxu0 0.0
  %893 = vmatprep.subr.mxu0 0.0
  %894 = vmatpush1.msra.mxu0 0.0
  %895 = vmatprep.subr.mxu0 0.0
  %896 = vmatpush1.msra.mxu0 0.0
  %897 = vmatprep.subr.mxu0 0.0
  %898 = vmatpush1.msra.mxu0 0.0
  %899 = vmatprep.subr.mxu0 0.0
  %900 = vmatpush1.msra.mxu0 0.0
  %901 = vmatprep.subr.mxu0 0.0
  %902 = vmatpush1.msra.mxu0 0.0
  %903 = vmatprep.subr.mxu0 0.0
  %904 = vmatpush1.msra.mxu0 0.0
  %905 = vmatprep.subr.mxu0 0.0
  %906 = vmatpush1.msra.mxu0 0.0
  %907 = vmatprep.subr.mxu0 0.0
  %908 = vmatpush1.msra.mxu0 0.0
  %909 = vmatprep.subr.mxu0 0.0
  %910 = vmatpush1.msra.mxu0 0.0
  %911 = vmatprep.subr.mxu0 0.0
  %912 = vmatpush1.msra.mxu0 0.0
  %913 = vmatprep.subr.mxu0 0.0
  %914 = vmatpush1.msra.mxu0 0.0
  %915 = vmatprep.subr.mxu0 0.0
  %916 = vmatpush1.msra.mxu0 0.0
  %917 = vmatprep.subr.mxu0 0.0
  %918 = vmatpush1.msra.mxu0 0.0
  %919 = vmatprep.subr.mxu0 0.0
  %920 = vmatpush1.msra.mxu0 0.0
  %921 = vmatprep.subr.mxu0 0.0
  %922 = vmatpush1.msra.mxu0 0.0
  %923 = vmatprep.subr.mxu0 0.0
  %924 = vmatpush1.msra.mxu0 0.0
  %925 = vmatprep.subr.mxu0 0.0
  %926 = vmatpush1.msra.mxu0 0.0
  %927 = vmatprep.subr.mxu0 0.0
  %928 = vmatpush1.msra.mxu0 0.0
  %929 = vmatprep.mubr.f32.mxu0 0.0
  %930 = vmatmul.mubr.f32.gmra.mrb[0].mxu0 %v863
  %v931 = vpop.f32.mrb[0].mxu0
  %v932 = vadd.f32 0.0, %v931
  %v933 = vpop.f32.mrb[0].mxu0
  %934 = vdwg.mxu0
  %v935 = vsel %vm524, %v761, 0
  %937 = vmatprep.subr.mxu0 0.0
  %938 = vmatpush1.msra.mxu0 %v87
  %939 = vmatprep.subr.mxu0 0.0
  %940 = vmatpush1.msra.mxu0 0.0
  %941 = vmatprep.subr.mxu0 0.0
  %942 = vmatpush1.msra.mxu0 0.0
  %943 = vmatprep.subr.mxu0 0.0
  %944 = vmatpush1.msra.mxu0 0.0
  %945 = vmatprep.subr.mxu0 0.0
  %946 = vmatpush1.msra.mxu0 0.0
  %947 = vmatprep.subr.mxu0 0.0
  %948 = vmatpush1.msra.mxu0 0.0
  %949 = vmatprep.subr.mxu0 0.0
  %950 = vmatpush1.msra.mxu0 0.0
  %951 = vmatprep.subr.mxu0 0.0
  %952 = vmatpush1.msra.mxu0 0.0
  %953 = vmatprep.subr.mxu0 0.0
  %954 = vmatpush1.msra.mxu0 0.0
  %955 = vmatprep.subr.mxu0 0.0
  %956 = vmatpush1.msra.mxu0 0.0
  %957 = vmatprep.subr.mxu0 0.0
  %958 = vmatpush1.msra.mxu0 0.0
  %959 = vmatprep.subr.mxu0 0.0
  %960 = vmatpush1.msra.mxu0 0.0
  %961 = vmatprep.subr.mxu0 0.0
  %962 = vmatpush1.msra.mxu0 0.0
  %963 = vmatprep.subr.mxu0 0.0
  %964 = vmatpush1.msra.mxu0 0.0
  %965 = vmatprep.subr.mxu0 0.0
  %966 = vmatpush1.msra.mxu0 0.0
  %967 = vmatprep.subr.mxu0 0.0
  %968 = vmatpush1.msra.mxu0 0.0
  %969 = vmatprep.subr.mxu0 0.0
  %970 = vmatpush1.msra.mxu0 0.0
  %971 = vmatprep.subr.mxu0 0.0
  %972 = vmatpush1.msra.mxu0 0.0
  %973 = vmatprep.subr.mxu0 0.0
  %974 = vmatpush1.msra.mxu0 0.0
  %975 = vmatprep.subr.mxu0 0.0
  %976 = vmatpush1.msra.mxu0 0.0
  %977 = vmatprep.subr.mxu0 0.0
  %978 = vmatpush1.msra.mxu0 0.0
  %979 = vmatprep.subr.mxu0 0.0
  %980 = vmatpush1.msra.mxu0 0.0
  %981 = vmatprep.subr.mxu0 0.0
  %982 = vmatpush1.msra.mxu0 0.0
  %983 = vmatprep.subr.mxu0 0.0
  %984 = vmatpush1.msra.mxu0 0.0
  %985 = vmatprep.subr.mxu0 0.0
  %986 = vmatpush1.msra.mxu0 0.0
  %987 = vmatprep.subr.mxu0 0.0
  %988 = vmatpush1.msra.mxu0 0.0
  %989 = vmatprep.subr.mxu0 0.0
  %990 = vmatpush1.msra.mxu0 0.0
  %991 = vmatprep.subr.mxu0 0.0
  %992 = vmatpush1.msra.mxu0 0.0
  %993 = vmatprep.subr.mxu0 0.0
  %994 = vmatpush1.msra.mxu0 0.0
  %995 = vmatprep.subr.mxu0 0.0
  %996 = vmatpush1.msra.mxu0 0.0
  %997 = vmatprep.subr.mxu0 0.0
  %998 = vmatpush1.msra.mxu0 0.0
  %999 = vmatprep.subr.mxu0 0.0
  %1000 = vmatpush1.msra.mxu0 0.0
  %1001 = vmatprep.mubr.f32.mxu0 0.0
  %1002 = vmatmul.mubr.f32.gmra.mrb[0].mxu0 %v935
  %v1003 = vpop.f32.mrb[0].mxu0
  %v1004 = vadd.f32 0.0, %v1003
  %v1005 = vpop.f32.mrb[0].mxu0
  %1006 = vdwg.mxu0
  %v1007 = vsel %vm524, %v765, 0
  %1009 = vmatprep.subr.mxu0 0.0
  %1010 = vmatpush1.msra.mxu0 %v88
  %1011 = vmatprep.subr.mxu0 0.0
  %1012 = vmatpush1.msra.mxu0 0.0
  %1013 = vmatprep.subr.mxu0 0.0
  %1014 = vmatpush1.msra.mxu0 0.0
  %1015 = vmatprep.subr.mxu0 0.0
  %1016 = vmatpush1.msra.mxu0 0.0
  %1017 = vmatprep.subr.mxu0 0.0
  %1018 = vmatpush1.msra.mxu0 0.0
  %1019 = vmatprep.subr.mxu0 0.0
  %1020 = vmatpush1.msra.mxu0 0.0
  %1021 = vmatprep.subr.mxu0 0.0
  %1022 = vmatpush1.msra.mxu0 0.0
  %1023 = vmatprep.subr.mxu0 0.0
  %1024 = vmatpush1.msra.mxu0 0.0
  %1025 = vmatprep.subr.mxu0 0.0
  %1026 = vmatpush1.msra.mxu0 0.0
  %1027 = vmatprep.subr.mxu0 0.0
  %1028 = vmatpush1.msra.mxu0 0.0
  %1029 = vmatprep.subr.mxu0 0.0
  %1030 = vmatpush1.msra.mxu0 0.0
  %1031 = vmatprep.subr.mxu0 0.0
  %1032 = vmatpush1.msra.mxu0 0.0
  %1033 = vmatprep.subr.mxu0 0.0
  %1034 = vmatpush1.msra.mxu0 0.0
  %1035 = vmatprep.subr.mxu0 0.0
  %1036 = vmatpush1.msra.mxu0 0.0
  %1037 = vmatprep.subr.mxu0 0.0
  %1038 = vmatpush1.msra.mxu0 0.0
  %1039 = vmatprep.subr.mxu0 0.0
  %1040 = vmatpush1.msra.mxu0 0.0
  %1041 = vmatprep.subr.mxu0 0.0
  %1042 = vmatpush1.msra.mxu0 0.0
  %1043 = vmatprep.subr.mxu0 0.0
  %1044 = vmatpush1.msra.mxu0 0.0
  %1045 = vmatprep.subr.mxu0 0.0
  %1046 = vmatpush1.msra.mxu0 0.0
  %1047 = vmatprep.subr.mxu0 0.0
  %1048 = vmatpush1.msra.mxu0 0.0
  %1049 = vmatprep.subr.mxu0 0.0
  %1050 = vmatpush1.msra.mxu0 0.0
  %1051 = vmatprep.subr.mxu0 0.0
  %1052 = vmatpush1.msra.mxu0 0.0
  %1053 = vmatprep.subr.mxu0 0.0
  %1054 = vmatpush1.msra.mxu0 0.0
  %1055 = vmatprep.subr.mxu0 0.0
  %1056 = vmatpush1.msra.mxu0 0.0
  %1057 = vmatprep.subr.mxu0 0.0
  %1058 = vmatpush1.msra.mxu0 0.0
  %1059 = vmatprep.subr.mxu0 0.0
  %1060 = vmatpush1.msra.mxu0 0.0
  %1061 = vmatprep.subr.mxu0 0.0
  %1062 = vmatpush1.msra.mxu0 0.0
  %1063 = vmatprep.subr.mxu0 0.0
  %1064 = vmatpush1.msra.mxu0 0.0
  %1065 = vmatprep.subr.mxu0 0.0
  %1066 = vmatpush1.msra.mxu0 0.0
  %1067 = vmatprep.subr.mxu0 0.0
  %1068 = vmatpush1.msra.mxu0 0.0
  %1069 = vmatprep.subr.mxu0 0.0
  %1070 = vmatpush1.msra.mxu0 0.0
  %1071 = vmatprep.subr.mxu0 0.0
  %1072 = vmatpush1.msra.mxu0 0.0
  %1073 = vmatprep.mubr.f32.mxu0 0.0
  %1074 = vmatmul.mubr.f32.gmra.mrb[0].mxu0 %v1007
  %v1075 = vpop.f32.mrb[0].mxu0
  %v1076 = vadd.f32 0.0, %v1075
  %v1077 = vpop.f32.mrb[0].mxu0
  %1078 = vdwg.mxu0
  %v1079 = vsel %vm524, %v769, 0
  %1081 = vmatprep.subr.mxu0 0.0
  %1082 = vmatpush1.msra.mxu0 %v89
  %1083 = vmatprep.subr.mxu0 0.0
  %1084 = vmatpush1.msra.mxu0 0.0
  %1085 = vmatprep.subr.mxu0 0.0
  %1086 = vmatpush1.msra.mxu0 0.0
  %1087 = vmatprep.subr.mxu0 0.0
  %1088 = vmatpush1.msra.mxu0 0.0
  %1089 = vmatprep.subr.mxu0 0.0
  %1090 = vmatpush1.msra.mxu0 0.0
  %1091 = vmatprep.subr.mxu0 0.0
  %1092 = vmatpush1.msra.mxu0 0.0
  %1093 = vmatprep.subr.mxu0 0.0
  %1094 = vmatpush1.msra.mxu0 0.0
  %1095 = vmatprep.subr.mxu0 0.0
  %1096 = vmatpush1.msra.mxu0 0.0
  %1097 = vmatprep.subr.mxu0 0.0
  %1098 = vmatpush1.msra.mxu0 0.0
  %1099 = vmatprep.subr.mxu0 0.0
  %1100 = vmatpush1.msra.mxu0 0.0
  %1101 = vmatprep.subr.mxu0 0.0
  %1102 = vmatpush1.msra.mxu0 0.0
  %1103 = vmatprep.subr.mxu0 0.0
  %1104 = vmatpush1.msra.mxu0 0.0
  %1105 = vmatprep.subr.mxu0 0.0
  %1106 = vmatpush1.msra.mxu0 0.0
  %1107 = vmatprep.subr.mxu0 0.0
  %1108 = vmatpush1.msra.mxu0 0.0
  %1109 = vmatprep.subr.mxu0 0.0
  %1110 = vmatpush1.msra.mxu0 0.0
  %1111 = vmatprep.subr.mxu0 0.0
  %1112 = vmatpush1.msra.mxu0 0.0
  %1113 = vmatprep.subr.mxu0 0.0
  %1114 = vmatpush1.msra.mxu0 0.0
  %1115 = vmatprep.subr.mxu0 0.0
  %1116 = vmatpush1.msra.mxu0 0.0
  %1117 = vmatprep.subr.mxu0 0.0
  %1118 = vmatpush1.msra.mxu0 0.0
  %1119 = vmatprep.subr.mxu0 0.0
  %1120 = vmatpush1.msra.mxu0 0.0
  %1121 = vmatprep.subr.mxu0 0.0
  %1122 = vmatpush1.msra.mxu0 0.0
  %1123 = vmatprep.subr.mxu0 0.0
  %1124 = vmatpush1.msra.mxu0 0.0
  %1125 = vmatprep.subr.mxu0 0.0
  %1126 = vmatpush1.msra.mxu0 0.0
  %1127 = vmatprep.subr.mxu0 0.0
  %1128 = vmatpush1.msra.mxu0 0.0
  %1129 = vmatprep.subr.mxu0 0.0
  %1130 = vmatpush1.msra.mxu0 0.0
  %1131 = vmatprep.subr.mxu0 0.0
  %1132 = vmatpush1.msra.mxu0 0.0
  %1133 = vmatprep.subr.mxu0 0.0
  %1134 = vmatpush1.msra.mxu0 0.0
  %1135 = vmatprep.subr.mxu0 0.0
  %1136 = vmatpush1.msra.mxu0 0.0
  %1137 = vmatprep.subr.mxu0 0.0
  %1138 = vmatpush1.msra.mxu0 0.0
  %1139 = vmatprep.subr.mxu0 0.0
  %1140 = vmatpush1.msra.mxu0 0.0
  %1141 = vmatprep.subr.mxu0 0.0
  %1142 = vmatpush1.msra.mxu0 0.0
  %1143 = vmatprep.subr.mxu0 0.0
  %1144 = vmatpush1.msra.mxu0 0.0
  %1145 = vmatprep.mubr.f32.mxu0 0.0
  %1146 = vmatmul.mubr.f32.gmra.mrb[0].mxu0 %v1079
  %v1147 = vpop.f32.mrb[0].mxu0
  %v1148 = vadd.f32 0.0, %v1147
  %v1149 = vpop.f32.mrb[0].mxu0
  %1150 = vdwg.mxu0
  %v1151 = vsel %vm524, %v773, 0
  %1153 = vmatprep.subr.mxu0 0.0
  %1154 = vmatpush1.msra.mxu0 %v90
  %1155 = vmatprep.subr.mxu0 0.0
  %1156 = vmatpush1.msra.mxu0 0.0
  %1157 = vmatprep.subr.mxu0 0.0
  %1158 = vmatpush1.msra.mxu0 0.0
  %1159 = vmatprep.subr.mxu0 0.0
  %1160 = vmatpush1.msra.mxu0 0.0
  %1161 = vmatprep.subr.mxu0 0.0
  %1162 = vmatpush1.msra.mxu0 0.0
  %1163 = vmatprep.subr.mxu0 0.0
  %1164 = vmatpush1.msra.mxu0 0.0
  %1165 = vmatprep.subr.mxu0 0.0
  %1166 = vmatpush1.msra.mxu0 0.0
  %1167 = vmatprep.subr.mxu0 0.0
  %1168 = vmatpush1.msra.mxu0 0.0
  %1169 = vmatprep.subr.mxu0 0.0
  %1170 = vmatpush1.msra.mxu0 0.0
  %1171 = vmatprep.subr.mxu0 0.0
  %1172 = vmatpush1.msra.mxu0 0.0
  %1173 = vmatprep.subr.mxu0 0.0
  %1174 = vmatpush1.msra.mxu0 0.0
  %1175 = vmatprep.subr.mxu0 0.0
  %1176 = vmatpush1.msra.mxu0 0.0
  %1177 = vmatprep.subr.mxu0 0.0
  %1178 = vmatpush1.msra.mxu0 0.0
  %1179 = vmatprep.subr.mxu0 0.0
  %1180 = vmatpush1.msra.mxu0 0.0
  %1181 = vmatprep.subr.mxu0 0.0
  %1182 = vmatpush1.msra.mxu0 0.0
  %1183 = vmatprep.subr.mxu0 0.0
  %1184 = vmatpush1.msra.mxu0 0.0
  %1185 = vmatprep.subr.mxu0 0.0
  %1186 = vmatpush1.msra.mxu0 0.0
  %1187 = vmatprep.subr.mxu0 0.0
  %1188 = vmatpush1.msra.mxu0 0.0
  %1189 = vmatprep.subr.mxu0 0.0
  %1190 = vmatpush1.msra.mxu0 0.0
  %1191 = vmatprep.subr.mxu0 0.0
  %1192 = vmatpush1.msra.mxu0 0.0
  %1193 = vmatprep.subr.mxu0 0.0
  %1194 = vmatpush1.msra.mxu0 0.0
  %1195 = vmatprep.subr.mxu0 0.0
  %1196 = vmatpush1.msra.mxu0 0.0
  %1197 = vmatprep.subr.mxu0 0.0
  %1198 = vmatpush1.msra.mxu0 0.0
  %1199 = vmatprep.subr.mxu0 0.0
  %1200 = vmatpush1.msra.mxu0 0.0
  %1201 = vmatprep.subr.mxu0 0.0
  %1202 = vmatpush1.msra.mxu0 0.0
  %1203 = vmatprep.subr.mxu0 0.0
  %1204 = vmatpush1.msra.mxu0 0.0
  %1205 = vmatprep.subr.mxu0 0.0
  %1206 = vmatpush1.msra.mxu0 0.0
  %1207 = vmatprep.subr.mxu0 0.0
  %1208 = vmatpush1.msra.mxu0 0.0
  %1209 = vmatprep.subr.mxu0 0.0
  %1210 = vmatpush1.msra.mxu0 0.0
  %1211 = vmatprep.subr.mxu0 0.0
  %1212 = vmatpush1.msra.mxu0 0.0
  %1213 = vmatprep.subr.mxu0 0.0
  %1214 = vmatpush1.msra.mxu0 0.0
  %1215 = vmatprep.subr.mxu0 0.0
  %1216 = vmatpush1.msra.mxu0 0.0
  %1217 = vmatprep.mubr.f32.mxu0 0.0
  %1218 = vmatmul.mubr.f32.gmra.mrb[0].mxu0 %v1151
  %v1219 = vpop.f32.mrb[0].mxu0
  %v1220 = vadd.f32 0.0, %v1219
  %v1221 = vpop.f32.mrb[0].mxu0
  %1222 = vdwg.mxu0
  %v1223 = vsel %vm524, %v777, 0
  %1225 = vmatprep.subr.mxu0 0.0
  %1226 = vmatpush1.msra.mxu0 %v91
  %1227 = vmatprep.subr.mxu0 0.0
  %1228 = vmatpush1.msra.mxu0 0.0
  %1229 = vmatprep.subr.mxu0 0.0
  %1230 = vmatpush1.msra.mxu0 0.0
  %1231 = vmatprep.subr.mxu0 0.0
  %1232 = vmatpush1.msra.mxu0 0.0
  %1233 = vmatprep.subr.mxu0 0.0
  %1234 = vmatpush1.msra.mxu0 0.0
  %1235 = vmatprep.subr.mxu0 0.0
  %1236 = vmatpush1.msra.mxu0 0.0
  %1237 = vmatprep.subr.mxu0 0.0
  %1238 = vmatpush1.msra.mxu0 0.0
  %1239 = vmatprep.subr.mxu0 0.0
  %1240 = vmatpush1.msra.mxu0 0.0
  %1241 = vmatprep.subr.mxu0 0.0
  %1242 = vmatpush1.msra.mxu0 0.0
  %1243 = vmatprep.subr.mxu0 0.0
  %1244 = vmatpush1.msra.mxu0 0.0
  %1245 = vmatprep.subr.mxu0 0.0
  %1246 = vmatpush1.msra.mxu0 0.0
  %1247 = vmatprep.subr.mxu0 0.0
  %1248 = vmatpush1.msra.mxu0 0.0
  %1249 = vmatprep.subr.mxu0 0.0
  %1250 = vmatpush1.msra.mxu0 0.0
  %1251 = vmatprep.subr.mxu0 0.0
  %1252 = vmatpush1.msra.mxu0 0.0
  %1253 = vmatprep.subr.mxu0 0.0
  %1254 = vmatpush1.msra.mxu0 0.0
  %1255 = vmatprep.subr.mxu0 0.0
  %1256 = vmatpush1.msra.mxu0 0.0
  %1257 = vmatprep.subr.mxu0 0.0
  %1258 = vmatpush1.msra.mxu0 0.0
  %1259 = vmatprep.subr.mxu0 0.0
  %1260 = vmatpush1.msra.mxu0 0.0
  %1261 = vmatprep.subr.mxu0 0.0
  %1262 = vmatpush1.msra.mxu0 0.0
  %1263 = vmatprep.subr.mxu0 0.0
  %1264 = vmatpush1.msra.mxu0 0.0
  %1265 = vmatprep.subr.mxu0 0.0
  %1266 = vmatpush1.msra.mxu0 0.0
  %1267 = vmatprep.subr.mxu0 0.0
  %1268 = vmatpush1.msra.mxu0 0.0
  %1269 = vmatprep.subr.mxu0 0.0
  %1270 = vmatpush1.msra.mxu0 0.0
  %1271 = vmatprep.subr.mxu0 0.0
  %1272 = vmatpush1.msra.mxu0 0.0
  %1273 = vmatprep.subr.mxu0 0.0
  %1274 = vmatpush1.msra.mxu0 0.0
  %1275 = vmatprep.subr.mxu0 0.0
  %1276 = vmatpush1.msra.mxu0 0.0
  %1277 = vmatprep.subr.mxu0 0.0
  %1278 = vmatpush1.msra.mxu0 0.0
  %1279 = vmatprep.subr.mxu0 0.0
  %1280 = vmatpush1.msra.mxu0 0.0
  %1281 = vmatprep.subr.mxu0 0.0
  %1282 = vmatpush1.msra.mxu0 0.0
  %1283 = vmatprep.subr.mxu0 0.0
  %1284 = vmatpush1.msra.mxu0 0.0
  %1285 = vmatprep.subr.mxu0 0.0
  %1286 = vmatpush1.msra.mxu0 0.0
  %1287 = vmatprep.subr.mxu0 0.0
  %1288 = vmatpush1.msra.mxu0 0.0
  %1289 = vmatprep.mubr.f32.mxu0 0.0
  %1290 = vmatmul.mubr.f32.gmra.mrb[0].mxu0 %v1223
  %v1291 = vpop.f32.mrb[0].mxu0
  %v1292 = vadd.f32 0.0, %v1291
  %v1293 = vpop.f32.mrb[0].mxu0
  %1294 = vdwg.mxu0
  %v1295 = vsel %vm524, %v781, 0
  %1297 = vmatprep.subr.mxu0 0.0
  %1298 = vmatpush1.msra.mxu0 %v92
  %1299 = vmatprep.subr.mxu0 0.0
  %1300 = vmatpush1.msra.mxu0 0.0
  %1301 = vmatprep.subr.mxu0 0.0
  %1302 = vmatpush1.msra.mxu0 0.0
  %1303 = vmatprep.subr.mxu0 0.0
  %1304 = vmatpush1.msra.mxu0 0.0
  %1305 = vmatprep.subr.mxu0 0.0
  %1306 = vmatpush1.msra.mxu0 0.0
  %1307 = vmatprep.subr.mxu0 0.0
  %1308 = vmatpush1.msra.mxu0 0.0
  %1309 = vmatprep.subr.mxu0 0.0
  %1310 = vmatpush1.msra.mxu0 0.0
  %1311 = vmatprep.subr.mxu0 0.0
  %1312 = vmatpush1.msra.mxu0 0.0
  %1313 = vmatprep.subr.mxu0 0.0
  %1314 = vmatpush1.msra.mxu0 0.0
  %1315 = vmatprep.subr.mxu0 0.0
  %1316 = vmatpush1.msra.mxu0 0.0
  %1317 = vmatprep.subr.mxu0 0.0
  %1318 = vmatpush1.msra.mxu0 0.0
  %1319 = vmatprep.subr.mxu0 0.0
  %1320 = vmatpush1.msra.mxu0 0.0
  %1321 = vmatprep.subr.mxu0 0.0
  %1322 = vmatpush1.msra.mxu0 0.0
  %1323 = vmatprep.subr.mxu0 0.0
  %1324 = vmatpush1.msra.mxu0 0.0
  %1325 = vmatprep.subr.mxu0 0.0
  %1326 = vmatpush1.msra.mxu0 0.0
  %1327 = vmatprep.subr.mxu0 0.0
  %1328 = vmatpush1.msra.mxu0 0.0
  %1329 = vmatprep.subr.mxu0 0.0
  %1330 = vmatpush1.msra.mxu0 0.0
  %1331 = vmatprep.subr.mxu0 0.0
  %1332 = vmatpush1.msra.mxu0 0.0
  %1333 = vmatprep.subr.mxu0 0.0
  %1334 = vmatpush1.msra.mxu0 0.0
  %1335 = vmatprep.subr.mxu0 0.0
  %1336 = vmatpush1.msra.mxu0 0.0
  %1337 = vmatprep.subr.mxu0 0.0
  %1338 = vmatpush1.msra.mxu0 0.0
  %1339 = vmatprep.subr.mxu0 0.0
  %1340 = vmatpush1.msra.mxu0 0.0
  %1341 = vmatprep.subr.mxu0 0.0
  %1342 = vmatpush1.msra.mxu0 0.0
  %1343 = vmatprep.subr.mxu0 0.0
  %1344 = vmatpush1.msra.mxu0 0.0
  %1345 = vmatprep.subr.mxu0 0.0
  %1346 = vmatpush1.msra.mxu0 0.0
  %1347 = vmatprep.subr.mxu0 0.0
  %1348 = vmatpush1.msra.mxu0 0.0
  %1349 = vmatprep.subr.mxu0 0.0
  %1350 = vmatpush1.msra.mxu0 0.0
  %1351 = vmatprep.subr.mxu0 0.0
  %1352 = vmatpush1.msra.mxu0 0.0
  %1353 = vmatprep.subr.mxu0 0.0
  %1354 = vmatpush1.msra.mxu0 0.0
  %1355 = vmatprep.subr.mxu0 0.0
  %1356 = vmatpush1.msra.mxu0 0.0
  %1357 = vmatprep.subr.mxu0 0.0
  %1358 = vmatpush1.msra.mxu0 0.0
  %1359 = vmatprep.subr.mxu0 0.0
  %1360 = vmatpush1.msra.mxu0 0.0
  %1361 = vmatprep.mubr.f32.mxu0 0.0
  %1362 = vmatmul.mubr.f32.gmra.mrb[0].mxu0 %v1295
  %v1363 = vpop.f32.mrb[0].mxu0
  %v1364 = vadd.f32 0.0, %v1363
  %v1365 = vpop.f32.mrb[0].mxu0
  %1366 = vdwg.mxu0
  %v1375 = vrot.slane %v932, 7
  %v1376 = vsel %vm509, %v1375, %v860
  %v1377 = vrot.slane %v1004, 6
  %v1378 = vsel %vm511, %v1377, %v1376
  %v1379 = vrot.slane %v1076, 5
  %v1380 = vsel %vm513, %v1379, %v1378
  %v1381 = vrot.slane %v1148, 4
  %v1382 = vsel %vm515, %v1381, %v1380
  %v1383 = vrot.slane %v1220, 3
  %v1384 = vsel %vm517, %v1383, %v1382
  %v1385 = vrot.slane %v1292, 2
  %v1386 = vsel %vm519, %v1385, %v1384
  %v1387 = vrot.slane %v1364, 1
  %v1388 = vsel %vm521, %v1387, %v1386
  %1389 = vrot.lane.b32.xlu0 %v1388, 32
  %v1390 = vpop.permute.xlu0 %1389
  %1393 = vrot.lane.b32.xlu0 %v93, 64
  %v1394 = vpop.permute.xlu0 %1393
  %v1396 = vsel %vm104, %v84, %v1390
  %vm1397 = vcmask 523264
  %v1398 = vsel %vm1397, %v1396, %v1394
  %v1399 = vld [vmem:[%s7] sm:$0xff]
  %v1400 = vld [vmem:[%s7 + $0x8] sm:$0xff]
  %v1401 = vld [vmem:[%s7 + $0x10] sm:$0xff]
  %v1402 = vld [vmem:[%s7 + $0x18] sm:$0xff]
  %v1403 = vld [vmem:[%s7 + $0x20] sm:$0xff]
  %v1404 = vld [vmem:[%s7 + $0x28] sm:$0xff]
  %v1405 = vld [vmem:[%s7 + $0x30] sm:$0xff]
  %v1406 = vld [vmem:[%s7 + $0x38] sm:$0xff]
  %v1407 = vld [vmem:[%s7 + $0x40] sm:$0xff]
  %v1408 = vld [vmem:[%s7 + $0x48] sm:$0xff]
  %v1409 = vld [vmem:[%s7 + $0x50] sm:$0xff]
  %v1410 = vld [vmem:[%s7 + $0x58] sm:$0xff]
  %v1411 = vld [vmem:[%s7 + $0x60] sm:$0xff]
  %v1412 = vld [vmem:[%s7 + $0x68] sm:$0xff]
  %v1413 = vld [vmem:[%s7 + $0x70] sm:$0xff]
  %v1414 = vld [vmem:[%s7 + $0x78] sm:$0xff]
  %v1415 = vld [vmem:[%s7 + $0x80] sm:$0xff]
  %v1416 = vld [vmem:[%s7 + $0x88] sm:$0xff]
  %v1417 = vld [vmem:[%s7 + $0x90] sm:$0xff]
  %v1418 = vld [vmem:[%s7 + $0x98] sm:$0xff]
  %v1419 = vld [vmem:[%s7 + $0xa0] sm:$0xff]
  %v1420 = vld [vmem:[%s7 + $0xa8] sm:$0xff]
  %v1421 = vld [vmem:[%s7 + $0xb0] sm:$0xff]
  %v1422 = vld [vmem:[%s7 + $0xb8] sm:$0xff]
  %v1423 = vld [vmem:[%s8] sm:$0x3]
  %v1425 = vlaneseq
  %v1426 = vshrl.u32 %v1425, 7
  %v1427 = vsub.s32 0, %v1426
  %v1428 = vrot.slane %v1423, %v1427
  %v1429 = vlaneseq
  %v1430 = vshrl.u32 %v1429, 7
  %v1431 = vsub.s32 1, %v1430
  %v1432 = vrot.slane %v1423, %v1431
  %vm1435 = vcmask 785408
  %v1437 = vsel %vm1435, %v1398, 0
  %1439 = vmatprep.subr.mxu0 %v1400
  %1440 = vmatpush1.msra.mxu0 %v1399
  %1441 = vmatprep.subr.mxu0 %v1402
  %1442 = vmatpush1.msra.mxu0 %v1401
  %1443 = vmatprep.subr.mxu0 %v1404
  %1444 = vmatpush1.msra.mxu0 %v1403
  %1445 = vmatprep.subr.mxu0 %v1406
  %1446 = vmatpush1.msra.mxu0 %v1405
  %1447 = vmatprep.subr.mxu0 %v1408
  %1448 = vmatpush1.msra.mxu0 %v1407
  %1449 = vmatprep.subr.mxu0 %v1410
  %1450 = vmatpush1.msra.mxu0 %v1409
  %1451 = vmatprep.subr.mxu0 %v1412
  %1452 = vmatpush1.msra.mxu0 %v1411
  %1453 = vmatprep.subr.mxu0 %v1414
  %1454 = vmatpush1.msra.mxu0 %v1413
  %1455 = vmatprep.subr.mxu0 %v1416
  %1456 = vmatpush1.msra.mxu0 %v1415
  %1457 = vmatprep.subr.mxu0 %v1418
  %1458 = vmatpush1.msra.mxu0 %v1417
  %1459 = vmatprep.subr.mxu0 %v1420
  %1460 = vmatpush1.msra.mxu0 %v1419
  %1461 = vmatprep.subr.mxu0 %v1422
  %1462 = vmatpush1.msra.mxu0 %v1421
  %1463 = vmatprep.subr.mxu0 0.0
  %1464 = vmatpush1.msra.mxu0 0.0
  %1465 = vmatprep.subr.mxu0 0.0
  %1466 = vmatpush1.msra.mxu0 0.0
  %1467 = vmatprep.subr.mxu0 0.0
  %1468 = vmatpush1.msra.mxu0 0.0
  %1469 = vmatprep.subr.mxu0 0.0
  %1470 = vmatpush1.msra.mxu0 0.0
  %1471 = vmatprep.subr.mxu0 0.0
  %1472 = vmatpush1.msra.mxu0 0.0
  %1473 = vmatprep.subr.mxu0 0.0
  %1474 = vmatpush1.msra.mxu0 0.0
  %1475 = vmatprep.subr.mxu0 0.0
  %1476 = vmatpush1.msra.mxu0 0.0
  %1477 = vmatprep.subr.mxu0 0.0
  %1478 = vmatpush1.msra.mxu0 0.0
  %1479 = vmatprep.subr.mxu0 0.0
  %1480 = vmatpush1.msra.mxu0 0.0
  %1481 = vmatprep.subr.mxu0 0.0
  %1482 = vmatpush1.msra.mxu0 0.0
  %1483 = vmatprep.subr.mxu0 0.0
  %1484 = vmatpush1.msra.mxu0 0.0
  %1485 = vmatprep.subr.mxu0 0.0
  %1486 = vmatpush1.msra.mxu0 0.0
  %1487 = vmatprep.subr.mxu0 0.0
  %1488 = vmatpush1.msra.mxu0 0.0
  %1489 = vmatprep.subr.mxu0 0.0
  %1490 = vmatpush1.msra.mxu0 0.0
  %1491 = vmatprep.subr.mxu0 0.0
  %1492 = vmatpush1.msra.mxu0 0.0
  %1493 = vmatprep.subr.mxu0 0.0
  %1494 = vmatpush1.msra.mxu0 0.0
  %1495 = vmatprep.subr.mxu0 0.0
  %1496 = vmatpush1.msra.mxu0 0.0
  %1497 = vmatprep.subr.mxu0 0.0
  %1498 = vmatpush1.msra.mxu0 0.0
  %1499 = vmatprep.subr.mxu0 0.0
  %1500 = vmatpush1.msra.mxu0 0.0
  %1501 = vmatprep.subr.mxu0 0.0
  %1502 = vmatpush1.msra.mxu0 0.0
  %1503 = vmatprep.mubr.f32.mxu0 0.0
  %1504 = vmatmul.mubr.f32.gmra.mrb[0].mxu0 %v1437
  %v1505 = vpop.f32.mrb[0].mxu0
  %v1506 = vadd.f32 %v1428, %v1505
  %v1507 = vpop.f32.mrb[0].mxu0
  %v1508 = vadd.f32 %v1432, %v1507
  %1509 = vdwg.mxu0
  %1511 = vrot.lane.b32.xlu0 %v1506, 32
  %v1512 = vpop.permute.xlu0 %1511
  %v1514 = vadd.f32 %v1506, %v1512
  %v1515 = vxor.u32 %v1514, 2147483648
  %v1516 = vmul.f32 %v1515, 1.442695
  %v1517 = vpow.pop %v1516
  %v1518 = vadd.f32 %v1517, 1.0
  %v1519 = vrcp.pop %v1518
  %v1520 = vmul.f32 1.0, %v1519
  %1522 = vrot.lane.b32.xlu0 %v1508, 32
  %v1523 = vpop.permute.xlu0 %1522
  %v1525 = vadd.f32 %v1506, %v1523
  %v1526 = vxor.u32 %v1525, 2147483648
  %v1527 = vmul.f32 %v1526, 1.442695
  %v1528 = vpow.pop %v1527
  %v1529 = vadd.f32 %v1528, 1.0
  %v1530 = vrcp.pop %v1529
  %v1531 = vmul.f32 1.0, %v1530
  %1532 = vrot.lane.b32.xlu0 %v1508, 96
  %v1533 = vpop.permute.xlu0 %1532
  %v1535 = vmul.f32 %v1520, %v1533
  %1537 = vrot.lane.b32.xlu0 %v1535, 64
  %v1538 = vpop.permute.xlu0 %1537
  %v1540 = vadd.f32 %v1506, %v1538
  %v1541 = vtanh.pop %v1540
  %v1542 = vsub.f32 1.0, %v1531
  %1544 = vrot.lane.b32.xlu0 %v1541, 96
  %v1545 = vpop.permute.xlu0 %1544
  %v1547 = vmul.f32 %v1542, %v1545
  %1548 = vrot.lane.b32.xlu0 %v93, 32
  %v1549 = vpop.permute.xlu0 %1548
  %v1551 = vmul.f32 %v1531, %v1549
  %v1552 = vadd.f32 %v1547, %v1551
  %1554 = vrot.lane.b32.xlu0 %v1552, 96
  %v1555 = vpop.permute.xlu0 %1554
  %1557 = vrot.lane.b32.xlu0 %v95, 32
  %v1558 = vpop.permute.xlu0 %1557
  %v1560 = vsel %vm104, %v1555, %v1558
  %v1561 = vld [vmem:[%s9] sm:$0xff]
  %v1562 = vld [vmem:[%s9 + $0x8] sm:$0xff]
  %v1563 = vld [vmem:[%s9 + $0x10] sm:$0xff]
  %v1564 = vld [vmem:[%s9 + $0x18] sm:$0xff]
  %v1565 = vld [vmem:[%s9 + $0x20] sm:$0xff]
  %v1566 = vld [vmem:[%s9 + $0x28] sm:$0xff]
  %v1567 = vld [vmem:[%s9 + $0x30] sm:$0xff]
  %v1568 = vld [vmem:[%s9 + $0x38] sm:$0xff]
  %v1569 = vld [vmem:[%s9 + $0x40] sm:$0xff]
  %v1570 = vld [vmem:[%s9 + $0x48] sm:$0xff]
  %v1571 = vld [vmem:[%s9 + $0x50] sm:$0xff]
  %v1572 = vld [vmem:[%s9 + $0x58] sm:$0xff]
  %v1573 = vld [vmem:[%s9 + $0x60] sm:$0xff]
  %v1574 = vld [vmem:[%s9 + $0x68] sm:$0xff]
  %v1575 = vld [vmem:[%s9 + $0x70] sm:$0xff]
  %v1576 = vld [vmem:[%s9 + $0x78] sm:$0xff]
  %v1577 = vld [vmem:[%s10] sm:$0x3]
  %v1579 = vlaneseq
  %v1580 = vshrl.u32 %v1579, 7
  %v1581 = vsub.s32 0, %v1580
  %v1582 = vrot.slane %v1577, %v1581
  %v1583 = vlaneseq
  %v1584 = vshrl.u32 %v1583, 7
  %v1585 = vsub.s32 1, %v1584
  %v1586 = vrot.slane %v1577, %v1585
  %v1590 = vsel %vm1397, %v1560, 0
  %1592 = vmatprep.subr.mxu0 %v1562
  %1593 = vmatpush1.msra.mxu0 %v1561
  %1594 = vmatprep.subr.mxu0 %v1564
  %1595 = vmatpush1.msra.mxu0 %v1563
  %1596 = vmatprep.subr.mxu0 %v1566
  %1597 = vmatpush1.msra.mxu0 %v1565
  %1598 = vmatprep.subr.mxu0 %v1568
  %1599 = vmatpush1.msra.mxu0 %v1567
  %1600 = vmatprep.subr.mxu0 %v1570
  %1601 = vmatpush1.msra.mxu0 %v1569
  %1602 = vmatprep.subr.mxu0 %v1572
  %1603 = vmatpush1.msra.mxu0 %v1571
  %1604 = vmatprep.subr.mxu0 %v1574
  %1605 = vmatpush1.msra.mxu0 %v1573
  %1606 = vmatprep.subr.mxu0 %v1576
  %1607 = vmatpush1.msra.mxu0 %v1575
  %1608 = vmatprep.subr.mxu0 0.0
  %1609 = vmatpush1.msra.mxu0 0.0
  %1610 = vmatprep.subr.mxu0 0.0
  %1611 = vmatpush1.msra.mxu0 0.0
  %1612 = vmatprep.subr.mxu0 0.0
  %1613 = vmatpush1.msra.mxu0 0.0
  %1614 = vmatprep.subr.mxu0 0.0
  %1615 = vmatpush1.msra.mxu0 0.0
  %1616 = vmatprep.subr.mxu0 0.0
  %1617 = vmatpush1.msra.mxu0 0.0
  %1618 = vmatprep.subr.mxu0 0.0
  %1619 = vmatpush1.msra.mxu0 0.0
  %1620 = vmatprep.subr.mxu0 0.0
  %1621 = vmatpush1.msra.mxu0 0.0
  %1622 = vmatprep.subr.mxu0 0.0
  %1623 = vmatpush1.msra.mxu0 0.0
  %1624 = vmatprep.subr.mxu0 0.0
  %1625 = vmatpush1.msra.mxu0 0.0
  %1626 = vmatprep.subr.mxu0 0.0
  %1627 = vmatpush1.msra.mxu0 0.0
  %1628 = vmatprep.subr.mxu0 0.0
  %1629 = vmatpush1.msra.mxu0 0.0
  %1630 = vmatprep.subr.mxu0 0.0
  %1631 = vmatpush1.msra.mxu0 0.0
  %1632 = vmatprep.subr.mxu0 0.0
  %1633 = vmatpush1.msra.mxu0 0.0
  %1634 = vmatprep.subr.mxu0 0.0
  %1635 = vmatpush1.msra.mxu0 0.0
  %1636 = vmatprep.subr.mxu0 0.0
  %1637 = vmatpush1.msra.mxu0 0.0
  %1638 = vmatprep.subr.mxu0 0.0
  %1639 = vmatpush1.msra.mxu0 0.0
  %1640 = vmatprep.subr.mxu0 0.0
  %1641 = vmatpush1.msra.mxu0 0.0
  %1642 = vmatprep.subr.mxu0 0.0
  %1643 = vmatpush1.msra.mxu0 0.0
  %1644 = vmatprep.subr.mxu0 0.0
  %1645 = vmatpush1.msra.mxu0 0.0
  %1646 = vmatprep.subr.mxu0 0.0
  %1647 = vmatpush1.msra.mxu0 0.0
  %1648 = vmatprep.subr.mxu0 0.0
  %1649 = vmatpush1.msra.mxu0 0.0
  %1650 = vmatprep.subr.mxu0 0.0
  %1651 = vmatpush1.msra.mxu0 0.0
  %1652 = vmatprep.subr.mxu0 0.0
  %1653 = vmatpush1.msra.mxu0 0.0
  %1654 = vmatprep.subr.mxu0 0.0
  %1655 = vmatpush1.msra.mxu0 0.0
  %1656 = vmatprep.mubr.f32.mxu0 0.0
  %1657 = vmatmul.mubr.f32.gmra.mrb[0].mxu0 %v1590
  %v1658 = vpop.f32.mrb[0].mxu0
  %v1659 = vadd.f32 %v1582, %v1658
  %v1660 = vpop.f32.mrb[0].mxu0
  %v1661 = vadd.f32 %v1586, %v1660
  %1662 = vdwg.mxu0
  %1664 = vrot.lane.b32.xlu0 %v1659, 32
  %v1665 = vpop.permute.xlu0 %1664
  %v1667 = vadd.f32 %v1659, %v1665
  %v1668 = vxor.u32 %v1667, 2147483648
  %v1669 = vmul.f32 %v1668, 1.442695
  %v1670 = vpow.pop %v1669
  %v1671 = vadd.f32 %v1670, 1.0
  %v1672 = vrcp.pop %v1671
  %v1673 = vmul.f32 1.0, %v1672
  %1675 = vrot.lane.b32.xlu0 %v1661, 32
  %v1676 = vpop.permute.xlu0 %1675
  %v1678 = vadd.f32 %v1659, %v1676
  %v1679 = vxor.u32 %v1678, 2147483648
  %v1680 = vmul.f32 %v1679, 1.442695
  %v1681 = vpow.pop %v1680
  %v1682 = vadd.f32 %v1681, 1.0
  %v1683 = vrcp.pop %v1682
  %v1684 = vmul.f32 1.0, %v1683
  %1685 = vrot.lane.b32.xlu0 %v1661, 96
  %v1686 = vpop.permute.xlu0 %1685
  %v1688 = vmul.f32 %v1673, %v1686
  %1690 = vrot.lane.b32.xlu0 %v1688, 64
  %v1691 = vpop.permute.xlu0 %1690
  %v1693 = vadd.f32 %v1659, %v1691
  %v1694 = vtanh.pop %v1693
  %v1695 = vsub.f32 1.0, %v1684
  %1697 = vrot.lane.b32.xlu0 %v1694, 96
  %v1698 = vpop.permute.xlu0 %1697
  %v1700 = vmul.f32 %v1695, %v1698
  %v1701 = vmul.f32 %v1684, %v1558
  %v1702 = vadd.f32 %v1700, %v1701
  %1703 = vst.msk [vmem:[%s14] sm:$0xff] %vm104, %v1555
  %1705 = vrot.lane.b32.xlu0 %v1702, 96
  %v1706 = vpop.permute.xlu0 %1705
  %s1708 = scalar_lea.vmem %s14, 8
  %1709 = vst.msk [vmem:[%s1708] sm:$0xff] %vm104, %v1706
  %v1710 = vld [vmem:[%s11] sm:$0xff]
  %v1711 = vld [vmem:[%s11 + $0x8] sm:$0xff]
  %v1712 = vld [vmem:[%s11 + $0x10] sm:$0xff]
  %v1713 = vld [vmem:[%s11 + $0x18] sm:$0xff]
  %v1714 = vld [vmem:[%s12] sm:$0x1]
  %v1716 = vlaneseq
  %v1717 = vshrl.u32 %v1716, 7
  %v1718 = vsub.s32 0, %v1717
  %v1719 = vrot.slane %v1714, %v1718
  %v1721 = vsel %vm104, %v1706, 0
  %1723 = vmatprep.subr.mxu0 0.0
  %1724 = vmatpush1.msra.mxu0 %v1710
  %1725 = vmatprep.subr.mxu0 0.0
  %1726 = vmatpush1.msra.mxu0 %v1711
  %1727 = vmatprep.subr.mxu0 0.0
  %1728 = vmatpush1.msra.mxu0 %v1712
  %1729 = vmatprep.subr.mxu0 0.0
  %1730 = vmatpush1.msra.mxu0 %v1713
  %1731 = vmatprep.subr.mxu0 0.0
  %1732 = vmatpush1.msra.mxu0 0.0
  %1733 = vmatprep.subr.mxu0 0.0
  %1734 = vmatpush1.msra.mxu0 0.0
  %1735 = vmatprep.subr.mxu0 0.0
  %1736 = vmatpush1.msra.mxu0 0.0
  %1737 = vmatprep.subr.mxu0 0.0
  %1738 = vmatpush1.msra.mxu0 0.0
  %1739 = vmatprep.subr.mxu0 0.0
  %1740 = vmatpush1.msra.mxu0 0.0
  %1741 = vmatprep.subr.mxu0 0.0
  %1742 = vmatpush1.msra.mxu0 0.0
  %1743 = vmatprep.subr.mxu0 0.0
  %1744 = vmatpush1.msra.mxu0 0.0
  %1745 = vmatprep.subr.mxu0 0.0
  %1746 = vmatpush1.msra.mxu0 0.0
  %1747 = vmatprep.subr.mxu0 0.0
  %1748 = vmatpush1.msra.mxu0 0.0
  %1749 = vmatprep.subr.mxu0 0.0
  %1750 = vmatpush1.msra.mxu0 0.0
  %1751 = vmatprep.subr.mxu0 0.0
  %1752 = vmatpush1.msra.mxu0 0.0
  %1753 = vmatprep.subr.mxu0 0.0
  %1754 = vmatpush1.msra.mxu0 0.0
  %1755 = vmatprep.subr.mxu0 0.0
  %1756 = vmatpush1.msra.mxu0 0.0
  %1757 = vmatprep.subr.mxu0 0.0
  %1758 = vmatpush1.msra.mxu0 0.0
  %1759 = vmatprep.subr.mxu0 0.0
  %1760 = vmatpush1.msra.mxu0 0.0
  %1761 = vmatprep.subr.mxu0 0.0
  %1762 = vmatpush1.msra.mxu0 0.0
  %1763 = vmatprep.subr.mxu0 0.0
  %1764 = vmatpush1.msra.mxu0 0.0
  %1765 = vmatprep.subr.mxu0 0.0
  %1766 = vmatpush1.msra.mxu0 0.0
  %1767 = vmatprep.subr.mxu0 0.0
  %1768 = vmatpush1.msra.mxu0 0.0
  %1769 = vmatprep.subr.mxu0 0.0
  %1770 = vmatpush1.msra.mxu0 0.0
  %1771 = vmatprep.subr.mxu0 0.0
  %1772 = vmatpush1.msra.mxu0 0.0
  %1773 = vmatprep.subr.mxu0 0.0
  %1774 = vmatpush1.msra.mxu0 0.0
  %1775 = vmatprep.subr.mxu0 0.0
  %1776 = vmatpush1.msra.mxu0 0.0
  %1777 = vmatprep.subr.mxu0 0.0
  %1778 = vmatpush1.msra.mxu0 0.0
  %1779 = vmatprep.subr.mxu0 0.0
  %1780 = vmatpush1.msra.mxu0 0.0
  %1781 = vmatprep.subr.mxu0 0.0
  %1782 = vmatpush1.msra.mxu0 0.0
  %1783 = vmatprep.subr.mxu0 0.0
  %1784 = vmatpush1.msra.mxu0 0.0
  %1785 = vmatprep.subr.mxu0 0.0
  %1786 = vmatpush1.msra.mxu0 0.0
  %1787 = vmatprep.mubr.f32.mxu0 0.0
  %1788 = vmatmul.mubr.f32.gmra.mrb[0].mxu0 %v1721
  %v1789 = vpop.f32.mrb[0].mxu0
  %v1790 = vadd.f32 %v1719, %v1789
  %v1791 = vpop.f32.mrb[0].mxu0
  %1792 = vdwg.mxu0
  %vm1793 = vcmask 130048
  %1794 = vst.msk [vmem:[%s13] sm:$0xff] %vm1793, %v1790
  // Predicated region
  $region50: #{decoder_forward.1} parent=0 // pred_check
    _
  $region51: #{decoder_forward.1} parent=0 // pred_check_branch
    %1796 = sbr.rel (0) target = $region53
  $region52: #{decoder_forward.1} parent=0 // pred_region
    _
  $region53: #{decoder_forward.1} parent=0 // pred_fallthru
    _
  // Predicated region
  $region54: #{decoder_forward.1} parent=0 // pred_check
    _
  $region55: #{decoder_forward.1} parent=0 // pred_check_branch
    %1798 = sbr.rel (0) target = $region57
  $region56: #{decoder_forward.1} parent=0 // pred_region
    _
  $region57: #{decoder_forward.1} parent=0 // pred_fallthru
    _
  // Predicated region
  $region58: #{decoder_forward.1} parent=0 // pred_check
    _
  $region59: #{decoder_forward.1} parent=0 // pred_check_branch
    %1800 = sbr.rel (0) target = $region61
  $region60: #{decoder_forward.1} parent=0 // pred_region
    _
  $region61: #{decoder_forward.1} parent=0 // pred_fallthru
    _
  // Predicated region
  $region62: #{decoder_forward.1} parent=0 // pred_check
    _
  $region63: #{decoder_forward.1} parent=0 // pred_check_branch
    %1802 = sbr.rel (0) target = $region65
  $region64: #{decoder_forward.1} parent=0 // pred_region
    _
  $region65: #{decoder_forward.1} parent=0 // pred_fallthru
    _
  // Predicated region
  $region66: #{decoder_forward.1} parent=0 // pred_check
    _
  $region67: #{decoder_forward.1} parent=0 // pred_check_branch
    %1804 = sbr.rel (0) target = $region69
  $region68: #{decoder_forward.1} parent=0 // pred_region
    _
  $region69: #{decoder_forward.1} parent=0 // pred_fallthru
    _
  // Predicated region
  $region70: #{decoder_forward.1} parent=0 // pred_check
    _
  $region71: #{decoder_forward.1} parent=0 // pred_check_branch
    %1806 = sbr.rel (0) target = $region73
  $region72: #{decoder_forward.1} parent=0 // pred_region
    _
  $region73: #{decoder_forward.1} parent=0 // pred_fallthru
    _

</llo_original>
